<compile_context>
chip_gen: v5e
topology: v5e:2x2
jax: 0.10.0
libtpu: 0.0.40
codegen_flags: <defaults>
</compile_context>

<pallas_src>
import functools
import math

import numpy as np
import jax
import jax.numpy as jnp
from jax import lax
from jax.experimental import pallas as pl
from jax.experimental.pallas import tpu as pltpu

_TAN_22_5 = math.tan(math.radians(22.5))
_TAN_67_5 = math.tan(math.radians(67.5))


def _round_up(v, m):
    return ((v + m - 1) // m) * m


def _gaussian_1d(kernel_size: int, sigma):
    """1-D gaussian weights (the torch 2-D kernel is their outer product)."""
    assert kernel_size % 2 == 1
    if sigma is None or sigma <= 0:
        sigma = 0.3 * ((kernel_size - 1) / 2 - 1) + 0.8
    x = np.linspace(-(kernel_size // 2), kernel_size // 2, kernel_size,
                    dtype=np.float32)
    g = np.exp(-(x ** 2) / (2.0 * np.float32(sigma) ** 2))
    g = g / g.sum()
    return tuple(float(v) for v in g.astype(np.float32))


# ----------------------------------------------------------------------------
# in-kernel helper: reflect-mode shifted neighbours with shared rolls / masks
# ----------------------------------------------------------------------------

def _reflect_roller(a, pos, extents, bmask_cache):
    """Returns reflect(d, axis): value of `a` at logical position (pos+d) with
    PyTorch 'reflect' boundary handling along `axis` (valid extent
    extents[axis]).  Rolls are cached per (axis, cyclic shift) so +/-d pairs
    and their boundary fix-ups share XLU work; boundary masks (pos == k) are
    cached kernel-wide in `bmask_cache` (iotas are hoisted by the caller)."""
    roll_cache = ({0: a}, {0: a})

    def _cyc(axis, s):
        c = roll_cache[axis]
        if s not in c:
            c[s] = pltpu.roll(a, (-s) % a.shape[axis], axis)
        return c[s]

    def reflect(d, axis):
        if d == 0:
            return a
        n = extents[axis]
        out = _cyc(axis, d)                       # out[k] = a[k + d]  (cyclic)
        bounds = range(n - d, n) if d > 0 else range(0, -d)
        for k in bounds:                          # image-boundary fix-ups
            src = 2 * (n - 1) - (k + d) if d > 0 else -(k + d)
            key = (axis, k)
            if key not in bmask_cache:
                bmask_cache[key] = pos[axis] == k
            out = jnp.where(bmask_cache[key], _cyc(axis, src - k), out)
        return out

    return reflect


# ----------------------------------------------------------------------------
# pass 1: gaussian smoothing + sobel gradients + non-maximum suppression
# ----------------------------------------------------------------------------

def _canny_pass1_kernel(x_top_ref, x_mid_ref, x_bot_ref,
                        sup_ref, max_ref, min_ref, *,
                        gauss, height, width, tile_h, halo):
    # assemble the halo-extended strip: (tile_h + 2*halo, Wp)
    x = jnp.concatenate([x_top_ref[0], x_mid_ref[0], x_bot_ref[0]], axis=0)
    p = len(gauss) // 2

    # hoisted iotas / boundary-mask cache (shared by every reflect fix-up)
    erow = lax.broadcasted_iota(jnp.int32, x.shape, 0)        # strip-local row
    lane = lax.broadcasted_iota(jnp.int32, x.shape, 1)
    row0 = pl.program_id(1) * tile_h - halo                   # local -> global
    grow = erow + row0
    pos = (grow, lane)
    extents = (height, width)
    bmask_cache = {}

    # --- separable gaussian (reflect boundary), vertical then horizontal ----
    r_x = _reflect_roller(x, pos, extents, bmask_cache)
    v = gauss[p] * x
    for a in range(1, p + 1):
        v = v + gauss[p + a] * (r_x(-a, 0) + r_x(a, 0))
    r_v = _reflect_roller(v, pos, extents, bmask_cache)
    sm = gauss[p] * v
    for a in range(1, p + 1):
        sm = sm + gauss[p + a] * (r_v(-a, 1) + r_v(a, 1))

    # --- separable sobel gradients (reflect boundary) ------------------------
    r_sm = _reflect_roller(sm, pos, extents, bmask_cache)
    up = r_sm(-1, 0)
    down = r_sm(1, 0)
    vx = up + 2.0 * sm + down                 # sobel_x column weights [1,2,1]
    vy = up - down                            # sobel_y column weights [1,0,-1]
    r_vx = _reflect_roller(vx, pos, extents, bmask_cache)
    r_vy = _reflect_roller(vy, pos, extents, bmask_cache)
    gx = r_vx(1, 1) - r_vx(-1, 1)
    gy = r_vy(-1, 1) + 2.0 * vy + r_vy(1, 1)
    grad = jnp.sqrt(gx * gx + gy * gy + 1e-8)   # epsilon matches the reference

    # --- direction bins (atan2-free partition, shared t1/t2) -----------------
    ax = jnp.abs(gx)
    ay = jnp.abs(gy)
    t1 = _TAN_22_5 * ax
    t2 = _TAN_67_5 * ax
    prod = gx * gy
    same = prod > 0.0
    opp = prod < 0.0
    zy = gy == 0.0
    zx = gx == 0.0
    m0 = zy | (same & (ay < t1)) | (opp & (ay <= t1))            # [0,22.5)+[157.5,180]
    m1 = same & (ay >= t1) & (ay < t2)                           # [22.5,67.5)
    m2 = (zx & (~zy)) | (same & (ay >= t2)) | (opp & (ay > t2))  # [67.5,112.5)
    m3 = opp & (ay > t1) & (ay <= t2)                            # [112.5,157.5)

    # --- non-maximum suppression (single fused select) -----------------------
    r_g = _reflect_roller(grad, pos, extents, bmask_cache)
    gup = r_g(-1, 0)
    gdn = r_g(1, 0)
    lft = r_g(-1, 1)
    rgt = r_g(1, 1)
    r_gup = _reflect_roller(gup, pos, extents, bmask_cache)
    r_gdn = _reflect_roller(gdn, pos, extents, bmask_cache)
    ul = r_gup(-1, 1)
    ur = r_gup(1, 1)
    dl = r_gdn(-1, 1)
    dr = r_gdn(1, 1)

    keep = ((m0 & (grad > rgt) & (grad > lft)) |
            (m1 & (grad > dl) & (grad > ur)) |
            (m2 & (grad > gup) & (grad > gdn)) |
            (m3 & (grad > dr) & (grad > ul)))
    sup = jnp.where(keep, grad, 0.0)
    sup_ref[0] = sup[halo:halo + tile_h]

    # --- per-strip extrema over the valid (non-halo, non-padded) region ------
    valid = ((erow >= halo) & (erow < halo + tile_h) &
             (grow < height) & (lane < width))
    max_ref[0, 0] = jnp.max(jnp.where(valid, sup, -jnp.inf), keepdims=True)
    min_ref[0, 0] = jnp.min(jnp.where(valid, sup, jnp.inf), keepdims=True)


# ----------------------------------------------------------------------------
# pass 2: double threshold + hysteresis (thresholds arrive via scalar prefetch)
# ----------------------------------------------------------------------------

def _canny_pass2_kernel(thr_ref, sup_ref, out_ref, *, height, width):
    sup = sup_ref[0]                          # (Hs, Wp)
    lo = thr_ref[0]
    hi = thr_ref[1]

    row = lax.broadcasted_iota(jnp.int32, sup.shape, 0)
    lane = lax.broadcasted_iota(jnp.int32, sup.shape, 1)
    pos = (row, lane)
    extents = (height, width)
    bmask_cache = {}

    strong = sup >= hi
    weak = (sup >= lo) & (sup < hi)

    s = jnp.where(strong, 1.0, 0.0)
    r_s = _reflect_roller(s, pos, extents, bmask_cache)
    su = r_s(-1, 0)
    sd = r_s(1, 0)
    r_su = _reflect_roller(su, pos, extents, bmask_cache)
    r_sd = _reflect_roller(sd, pos, extents, bmask_cache)
    # OR over the 3x3 reflect neighbourhood (== "has strong neighbour")
    nb = jnp.maximum(s, jnp.maximum(su, sd))
    for roller in (r_s, r_su, r_sd):
        nb = jnp.maximum(nb, roller(-1, 1))
        nb = jnp.maximum(nb, roller(1, 1))

    mask = strong | (weak & (nb > 0.0))
    res = jnp.where(mask, sup, 0.0)
    out_ref[0] = res[:height, :width]         # lane-cropped store: no XLA crop


# ----------------------------------------------------------------------------
# wrapper
# ----------------------------------------------------------------------------

def canny_edge_detector(x,
                        gaussian_kernel_size: int = 5,
                        gaussian_sigma: float = 1.0,
                        high_threshold: float = 0.25,
                        low_threshold: float = 0.1):
    """x: NCHW float input with C == 1 (matches the torch module's conv weights)."""
    assert gaussian_kernel_size % 2 == 1
    assert 0 < high_threshold < 1 and 0 < low_threshold < 1
    N, C, H, W = x.shape
    assert C == 1, "CannyEdgeDetector expects single-channel (grayscale) input"
    p = gaussian_kernel_size // 2
    assert H > max(p, 1) and W > max(p, 1), "reflect padding needs pad < dim"

    B = N * C
    Wp = _round_up(W, 128)                    # lane-dense width

    # ---- generation-aware VMEM budget ---------------------------------------
    try:
        vmem_cap = int(pltpu.get_tpu_info().vmem_capacity_bytes)
    except Exception:
        vmem_cap = 64 * 1024 * 1024           # conservative (v7x per-core VMEM)
    vmem_budget = max(32 * 1024 * 1024, vmem_cap - 8 * 1024 * 1024)

    # ---- H strip tiling: bound pass-1 VMEM to O(strip) ----------------------
    HALO = _round_up(max(p + 2, 1), 8)        # gaussian p + sobel 1 + NMS 1
    LIVE_PLANES = 26                          # ~live full-strip temporaries
    row_bytes = Wp * 4
    budget_rows = int(0.4 * vmem_budget / (LIVE_PLANES * row_bytes))
    max_tile = max(HALO, min(512, ((budget_rows - 2 * HALO) // HALO) * HALO))
    Hq = _round_up(H, 8)
    if Hq <= max_tile:
        TILE_H, NT = _round_up(Hq, HALO), 1
    else:
        NT = -(-Hq // max_tile)
        TILE_H = _round_up(-(-Hq // NT), HALO)
        NT = -(-Hq // TILE_H)
    Hs = NT * TILE_H

    xb = x.reshape(B, H, W).astype(jnp.float32)
    if Hs != H or Wp != W:
        # TODO(synk): fold this zero-pad into pass-1's input DMA; it is skipped
        # entirely when H and W are already strip/lane aligned.
        xb = jnp.pad(xb, ((0, 0), (0, Hs - H), (0, Wp - W)))

    gauss = _gaussian_1d(gaussian_kernel_size, gaussian_sigma)

    ext_rows = TILE_H + 2 * HALO
    vmem1 = int(min(vmem_budget,
                    max(32 * 1024 * 1024,
                        (LIVE_PLANES + 8) * ext_rows * row_bytes)))
    vmem2 = int(min(vmem_budget,
                    max(32 * 1024 * 1024, 16 * Hs * row_bytes)))
    # TODO(synk): strip-tile pass 2 (1-row halo) as well for planes so large
    # that ~16 full planes exceed the v7x 64 MiB budget.

    R = TILE_H // HALO                         # halo blocks per strip
    NBLK = Hs // HALO                          # 8-row blocks in padded array

    cparams1 = pltpu.CompilerParams(
        dimension_semantics=("parallel", "parallel"),   # images x strips
        vmem_limit_bytes=vmem1)
    cparams2 = pltpu.CompilerParams(
        dimension_semantics=("parallel",),
        vmem_limit_bytes=vmem2)

    # ---- pass 1: smooth + sobel + NMS, per-strip extrema --------------------
    sup, bmax, bmin = pl.pallas_call(
        functools.partial(_canny_pass1_kernel, gauss=gauss, height=H, width=W,
                          tile_h=TILE_H, halo=HALO),
        out_shape=(jax.ShapeDtypeStruct((B, Hs, Wp), jnp.float32),
                   jax.ShapeDtypeStruct((B, NT, 1, 1), jnp.float32),
                   jax.ShapeDtypeStruct((B, NT, 1, 1), jnp.float32)),
        grid=(B, NT),
        in_specs=[
            # top halo (clamped at the first strip; contents there are never
            # consumed thanks to the global-row reflect fix-ups)
            pl.BlockSpec((1, HALO, Wp),
                         lambda b, t: (b, jnp.maximum(t * R - 1, 0), 0)),
            # main strip
            pl.BlockSpec((1, TILE_H, Wp), lambda b, t: (b, t, 0)),
            # bottom halo (clamped at the last strip)
            pl.BlockSpec((1, HALO, Wp),
                         lambda b, t: (b, jnp.minimum((t + 1) * R, NBLK - 1), 0)),
        ],
        out_specs=(pl.BlockSpec((1, TILE_H, Wp), lambda b, t: (b, t, 0)),
                   pl.BlockSpec((1, 1, 1, 1), lambda b, t: (b, t, 0, 0)),
                   pl.BlockSpec((1, 1, 1, 1), lambda b, t: (b, t, 0, 0))),
        compiler_params=cparams1,
    )(xb, xb, xb)

    # ---- global extrema + thresholds (tiny reduction in plain JAX) ----------
    max_v = jnp.max(bmax)
    min_v = jnp.min(bmin)
    rng = max_v - min_v
    thr = jnp.stack([min_v + rng * low_threshold,
                     min_v + rng * high_threshold]).astype(jnp.float32)

    # ---- pass 2: double threshold + hysteresis (unpadded output) ------------
    out = pl.pallas_call(
        functools.partial(_canny_pass2_kernel, height=H, width=W),
        out_shape=jax.ShapeDtypeStruct((B, H, W), jnp.float32),
        grid_spec=pltpu.PrefetchScalarGridSpec(
            num_scalar_prefetch=1,
            grid=(B,),
            in_specs=[pl.BlockSpec((1, Hs, Wp), lambda b, thr_ref: (b, 0, 0))],
            out_specs=pl.BlockSpec((1, H, W), lambda b, thr_ref: (b, 0, 0))),
        compiler_params=cparams2,
    )(thr, sup)

    return out.reshape(N, C, H, W)


if __name__ == "__main__":
    key = jax.random.PRNGKey(0)
    # small grayscale batch: N=2, C=1, H=W=16 (NCHW, like the torch module)
    x = jax.random.uniform(key, (2, 1, 16, 16), dtype=jnp.float32)
    fn = jax.jit(canny_edge_detector)
    edges = fn(x)
    jax.block_until_ready(edges)
    print("KERNEL_OK")
</pallas_src>

<mosaic_0001>
module attributes {stable_mosaic.version = 11 : i64} {
  func.func @_canny_pass1_kernel(%arg0: i32, %arg1: i32, %arg2: memref<1x8x128xf32, #tpu.memory_space<vmem>>, %arg3: memref<1x16x128xf32, #tpu.memory_space<vmem>>, %arg4: memref<1x8x128xf32, #tpu.memory_space<vmem>>, %arg5: memref<1x16x128xf32, #tpu.memory_space<vmem>>, %arg6: memref<1x1x1x1xf32, #tpu.memory_space<vmem>>, %arg7: memref<1x1x1x1xf32, #tpu.memory_space<vmem>>) attributes {dimension_semantics = [#tpu.dimension_semantics<parallel>, #tpu.dimension_semantics<parallel>], iteration_bounds = array<i64: 2, 1>, scalar_prefetch = 0 : i64, scratch_operands = 0 : i64, tpu.core_type = #tpu.core_type<tc>, window_params = [{transform_indices = @transform_0, window_bounds = array<i64: 1, 8, 128>}, {transform_indices = @transform_1, window_bounds = array<i64: 1, 16, 128>}, {transform_indices = @transform_2, window_bounds = array<i64: 1, 8, 128>}, {transform_indices = @transform_3, window_bounds = array<i64: 1, 16, 128>}, {transform_indices = @transform_4, window_bounds = array<i64: 1, 1, 1, 1>}, {transform_indices = @transform_5, window_bounds = array<i64: 1, 1, 1, 1>}]} {
    %c0 = arith.constant 0 : index
    %c0_0 = arith.constant 0 : index
    %c0_1 = arith.constant 0 : index
    %0 = vector.load %arg2[%c0, %c0_0, %c0_1] : memref<1x8x128xf32, #tpu.memory_space<vmem>>, vector<1x8x128xf32>
    %1 = vector.shape_cast %0 : vector<1x8x128xf32> to vector<8x128xf32>
    %c0_2 = arith.constant 0 : index
    %c0_3 = arith.constant 0 : index
    %c0_4 = arith.constant 0 : index
    %2 = vector.load %arg3[%c0_2, %c0_3, %c0_4] : memref<1x16x128xf32, #tpu.memory_space<vmem>>, vector<1x16x128xf32>
    %3 = vector.shape_cast %2 : vector<1x16x128xf32> to vector<16x128xf32>
    %c0_5 = arith.constant 0 : index
    %c0_6 = arith.constant 0 : index
    %c0_7 = arith.constant 0 : index
    %4 = vector.load %arg4[%c0_5, %c0_6, %c0_7] : memref<1x8x128xf32, #tpu.memory_space<vmem>>, vector<1x8x128xf32>
    %5 = vector.shape_cast %4 : vector<1x8x128xf32> to vector<8x128xf32>
    %6 = tpu.concatenate %1, %3, %5 in 0 : vector<8x128xf32>, vector<16x128xf32>, vector<8x128xf32> -> vector<32x128xf32>
    %7 = tpu.iota {dimensions = array<i32: 0>} : vector<32x128xi32>
    %8 = tpu.iota {dimensions = array<i32: 1>} : vector<32x128xi32>
    %c16_i32 = arith.constant 16 : i32
    %9 = arith.muli %arg1, %c16_i32 : i32
    %c8_i32 = arith.constant 8 : i32
    %10 = arith.subi %9, %c8_i32 : i32
    %11 = vector.broadcast %10 : i32 to vector<32x128xi32>
    %12 = arith.addi %7, %11 : vector<32x128xi32>
    %cst = arith.constant 0.402619958 : f32
    %13 = vector.broadcast %cst : f32 to vector<32x128xf32>
    %14 = arith.mulf %13, %6 : vector<32x128xf32>
    %c1_i32 = arith.constant 1 : i32
    %15 = tpu.dynamic_rotate %6 by %c1_i32 dim 0 : vector<32x128xf32>, i32 -> vector<32x128xf32>
    %c0_i32 = arith.constant 0 : i32
    %16 = vector.broadcast %c0_i32 : i32 to vector<32x128xi32>
    %17 = arith.cmpi eq, %12, %16 : vector<32x128xi32>
    %c31_i32 = arith.constant 31 : i32
    %18 = tpu.dynamic_rotate %6 by %c31_i32 dim 0 : vector<32x128xf32>, i32 -> vector<32x128xf32>
    %19 = arith.select %17, %18, %15 : vector<32x128xi1>, vector<32x128xf32>
    %c15_i32 = arith.constant 15 : i32
    %20 = vector.broadcast %c15_i32 : i32 to vector<32x128xi32>
    %21 = arith.cmpi eq, %12, %20 : vector<32x128xi32>
    %22 = arith.select %21, %15, %18 : vector<32x128xi1>, vector<32x128xf32>
    %23 = arith.addf %19, %22 : vector<32x128xf32>
    %cst_8 = arith.constant 0.244201362 : f32
    %24 = vector.broadcast %cst_8 : f32 to vector<32x128xf32>
    %25 = arith.mulf %24, %23 : vector<32x128xf32>
    %26 = arith.addf %14, %25 : vector<32x128xf32>
    %c2_i32 = arith.constant 2 : i32
    %27 = tpu.dynamic_rotate %6 by %c2_i32 dim 0 : vector<32x128xf32>, i32 -> vector<32x128xf32>
    %c30_i32 = arith.constant 30 : i32
    %28 = tpu.dynamic_rotate %6 by %c30_i32 dim 0 : vector<32x128xf32>, i32 -> vector<32x128xf32>
    %29 = arith.select %17, %28, %27 : vector<32x128xi1>, vector<32x128xf32>
    %c1_i32_9 = arith.constant 1 : i32
    %30 = vector.broadcast %c1_i32_9 : i32 to vector<32x128xi32>
    %31 = arith.cmpi eq, %12, %30 : vector<32x128xi32>
    %32 = arith.select %31, %6, %29 : vector<32x128xi1>, vector<32x128xf32>
    %c14_i32 = arith.constant 14 : i32
    %33 = vector.broadcast %c14_i32 : i32 to vector<32x128xi32>
    %34 = arith.cmpi eq, %12, %33 : vector<32x128xi32>
    %35 = arith.select %34, %6, %28 : vector<32x128xi1>, vector<32x128xf32>
    %36 = arith.select %21, %27, %35 : vector<32x128xi1>, vector<32x128xf32>
    %37 = arith.addf %32, %36 : vector<32x128xf32>
    %cst_10 = arith.constant 0.0544886887 : f32
    %38 = vector.broadcast %cst_10 : f32 to vector<32x128xf32>
    %39 = arith.mulf %38, %37 : vector<32x128xf32>
    %40 = arith.addf %26, %39 : vector<32x128xf32>
    %cst_11 = arith.constant 0.402619958 : f32
    %41 = vector.broadcast %cst_11 : f32 to vector<32x128xf32>
    %42 = arith.mulf %41, %40 : vector<32x128xf32>
    %c1_i32_12 = arith.constant 1 : i32
    %43 = tpu.dynamic_rotate %40 by %c1_i32_12 dim 1 : vector<32x128xf32>, i32 -> vector<32x128xf32>
    %c0_i32_13 = arith.constant 0 : i32
    %44 = vector.broadcast %c0_i32_13 : i32 to vector<32x128xi32>
    %45 = arith.cmpi eq, %8, %44 : vector<32x128xi32>
    %c127_i32 = arith.constant 127 : i32
    %46 = tpu.dynamic_rotate %40 by %c127_i32 dim 1 : vector<32x128xf32>, i32 -> vector<32x128xf32>
    %47 = arith.select %45, %46, %43 : vector<32x128xi1>, vector<32x128xf32>
    %c15_i32_14 = arith.constant 15 : i32
    %48 = vector.broadcast %c15_i32_14 : i32 to vector<32x128xi32>
    %49 = arith.cmpi eq, %8, %48 : vector<32x128xi32>
    %50 = arith.select %49, %43, %46 : vector<32x128xi1>, vector<32x128xf32>
    %51 = arith.addf %47, %50 : vector<32x128xf32>
    %cst_15 = arith.constant 0.244201362 : f32
    %52 = vector.broadcast %cst_15 : f32 to vector<32x128xf32>
    %53 = arith.mulf %52, %51 : vector<32x128xf32>
    %54 = arith.addf %42, %53 : vector<32x128xf32>
    %c2_i32_16 = arith.constant 2 : i32
    %55 = tpu.dynamic_rotate %40 by %c2_i32_16 dim 1 : vector<32x128xf32>, i32 -> vector<32x128xf32>
    %c126_i32 = arith.constant 126 : i32
    %56 = tpu.dynamic_rotate %40 by %c126_i32 dim 1 : vector<32x128xf32>, i32 -> vector<32x128xf32>
    %57 = arith.select %45, %56, %55 : vector<32x128xi1>, vector<32x128xf32>
    %c1_i32_17 = arith.constant 1 : i32
    %58 = vector.broadcast %c1_i32_17 : i32 to vector<32x128xi32>
    %59 = arith.cmpi eq, %8, %58 : vector<32x128xi32>
    %60 = arith.select %59, %40, %57 : vector<32x128xi1>, vector<32x128xf32>
    %c14_i32_18 = arith.constant 14 : i32
    %61 = vector.broadcast %c14_i32_18 : i32 to vector<32x128xi32>
    %62 = arith.cmpi eq, %8, %61 : vector<32x128xi32>
    %63 = arith.select %62, %40, %56 : vector<32x128xi1>, vector<32x128xf32>
    %64 = arith.select %49, %55, %63 : vector<32x128xi1>, vector<32x128xf32>
    %65 = arith.addf %60, %64 : vector<32x128xf32>
    %cst_19 = arith.constant 0.0544886887 : f32
    %66 = vector.broadcast %cst_19 : f32 to vector<32x128xf32>
    %67 = arith.mulf %66, %65 : vector<32x128xf32>
    %68 = arith.addf %54, %67 : vector<32x128xf32>
    %c1_i32_20 = arith.constant 1 : i32
    %69 = tpu.dynamic_rotate %68 by %c1_i32_20 dim 0 : vector<32x128xf32>, i32 -> vector<32x128xf32>
    %c31_i32_21 = arith.constant 31 : i32
    %70 = tpu.dynamic_rotate %68 by %c31_i32_21 dim 0 : vector<32x128xf32>, i32 -> vector<32x128xf32>
    %71 = arith.select %17, %70, %69 : vector<32x128xi1>, vector<32x128xf32>
    %72 = arith.select %21, %69, %70 : vector<32x128xi1>, vector<32x128xf32>
    %cst_22 = arith.constant 2.000000e+00 : f32
    %73 = vector.broadcast %cst_22 : f32 to vector<32x128xf32>
    %74 = arith.mulf %73, %68 : vector<32x128xf32>
    %75 = arith.addf %71, %74 : vector<32x128xf32>
    %76 = arith.addf %75, %72 : vector<32x128xf32>
    %77 = arith.subf %71, %72 : vector<32x128xf32>
    %c127_i32_23 = arith.constant 127 : i32
    %78 = tpu.dynamic_rotate %76 by %c127_i32_23 dim 1 : vector<32x128xf32>, i32 -> vector<32x128xf32>
    %c1_i32_24 = arith.constant 1 : i32
    %79 = tpu.dynamic_rotate %76 by %c1_i32_24 dim 1 : vector<32x128xf32>, i32 -> vector<32x128xf32>
    %80 = arith.select %49, %79, %78 : vector<32x128xi1>, vector<32x128xf32>
    %81 = arith.select %45, %78, %79 : vector<32x128xi1>, vector<32x128xf32>
    %82 = arith.subf %80, %81 : vector<32x128xf32>
    %c1_i32_25 = arith.constant 1 : i32
    %83 = tpu.dynamic_rotate %77 by %c1_i32_25 dim 1 : vector<32x128xf32>, i32 -> vector<32x128xf32>
    %c127_i32_26 = arith.constant 127 : i32
    %84 = tpu.dynamic_rotate %77 by %c127_i32_26 dim 1 : vector<32x128xf32>, i32 -> vector<32x128xf32>
    %85 = arith.select %45, %84, %83 : vector<32x128xi1>, vector<32x128xf32>
    %cst_27 = arith.constant 2.000000e+00 : f32
    %86 = vector.broadcast %cst_27 : f32 to vector<32x128xf32>
    %87 = arith.mulf %86, %77 : vector<32x128xf32>
    %88 = arith.addf %85, %87 : vector<32x128xf32>
    %89 = arith.select %49, %83, %84 : vector<32x128xi1>, vector<32x128xf32>
    %90 = arith.addf %88, %89 : vector<32x128xf32>
    %91 = arith.mulf %82, %82 : vector<32x128xf32>
    %92 = arith.mulf %90, %90 : vector<32x128xf32>
    %93 = arith.addf %91, %92 : vector<32x128xf32>
    %cst_28 = arith.constant 9.99999993E-9 : f32
    %94 = vector.broadcast %cst_28 : f32 to vector<32x128xf32>
    %95 = arith.addf %93, %94 : vector<32x128xf32>
    %96 = math.sqrt %95 : vector<32x128xf32>
    %97 = math.absf %82 : vector<32x128xf32>
    %98 = math.absf %90 : vector<32x128xf32>
    %cst_29 = arith.constant 0.414213568 : f32
    %99 = vector.broadcast %cst_29 : f32 to vector<32x128xf32>
    %100 = arith.mulf %99, %97 : vector<32x128xf32>
    %cst_30 = arith.constant 2.41421366 : f32
    %101 = vector.broadcast %cst_30 : f32 to vector<32x128xf32>
    %102 = arith.mulf %101, %97 : vector<32x128xf32>
    %103 = arith.mulf %82, %90 : vector<32x128xf32>
    %cst_31 = arith.constant 0.000000e+00 : f32
    %104 = vector.broadcast %cst_31 : f32 to vector<32x128xf32>
    %105 = arith.cmpf ogt, %103, %104 : vector<32x128xf32>
    %cst_32 = arith.constant 0.000000e+00 : f32
    %106 = vector.broadcast %cst_32 : f32 to vector<32x128xf32>
    %107 = arith.cmpf olt, %103, %106 : vector<32x128xf32>
    %cst_33 = arith.constant 0.000000e+00 : f32
    %108 = vector.broadcast %cst_33 : f32 to vector<32x128xf32>
    %109 = arith.cmpf oeq, %90, %108 : vector<32x128xf32>
    %cst_34 = arith.constant 0.000000e+00 : f32
    %110 = vector.broadcast %cst_34 : f32 to vector<32x128xf32>
    %111 = arith.cmpf oeq, %82, %110 : vector<32x128xf32>
    %112 = arith.cmpf olt, %98, %100 : vector<32x128xf32>
    %113 = arith.andi %105, %112 : vector<32x128xi1>
    %114 = arith.ori %109, %113 : vector<32x128xi1>
    %115 = arith.cmpf ole, %98, %100 : vector<32x128xf32>
    %116 = arith.andi %107, %115 : vector<32x128xi1>
    %117 = arith.ori %114, %116 : vector<32x128xi1>
    %118 = arith.cmpf oge, %98, %100 : vector<32x128xf32>
    %119 = arith.andi %105, %118 : vector<32x128xi1>
    %120 = arith.cmpf olt, %98, %102 : vector<32x128xf32>
    %121 = arith.andi %119, %120 : vector<32x128xi1>
    %cst_35 = arith.constant dense<true> : vector<32x128xi1>
    %122 = arith.xori %109, %cst_35 : vector<32x128xi1>
    %123 = arith.andi %111, %122 : vector<32x128xi1>
    %124 = arith.cmpf oge, %98, %102 : vector<32x128xf32>
    %125 = arith.andi %105, %124 : vector<32x128xi1>
    %126 = arith.ori %123, %125 : vector<32x128xi1>
    %127 = arith.cmpf ogt, %98, %102 : vector<32x128xf32>
    %128 = arith.andi %107, %127 : vector<32x128xi1>
    %129 = arith.ori %126, %128 : vector<32x128xi1>
    %130 = arith.cmpf ogt, %98, %100 : vector<32x128xf32>
    %131 = arith.andi %107, %130 : vector<32x128xi1>
    %132 = arith.cmpf ole, %98, %102 : vector<32x128xf32>
    %133 = arith.andi %131, %132 : vector<32x128xi1>
    %c1_i32_36 = arith.constant 1 : i32
    %134 = tpu.dynamic_rotate %96 by %c1_i32_36 dim 0 : vector<32x128xf32>, i32 -> vector<32x128xf32>
    %c31_i32_37 = arith.constant 31 : i32
    %135 = tpu.dynamic_rotate %96 by %c31_i32_37 dim 0 : vector<32x128xf32>, i32 -> vector<32x128xf32>
    %136 = arith.select %17, %135, %134 : vector<32x128xi1>, vector<32x128xf32>
    %137 = arith.select %21, %134, %135 : vector<32x128xi1>, vector<32x128xf32>
    %c1_i32_38 = arith.constant 1 : i32
    %138 = tpu.dynamic_rotate %96 by %c1_i32_38 dim 1 : vector<32x128xf32>, i32 -> vector<32x128xf32>
    %c127_i32_39 = arith.constant 127 : i32
    %139 = tpu.dynamic_rotate %96 by %c127_i32_39 dim 1 : vector<32x128xf32>, i32 -> vector<32x128xf32>
    %140 = arith.select %45, %139, %138 : vector<32x128xi1>, vector<32x128xf32>
    %141 = arith.select %49, %138, %139 : vector<32x128xi1>, vector<32x128xf32>
    %c1_i32_40 = arith.constant 1 : i32
    %142 = tpu.dynamic_rotate %136 by %c1_i32_40 dim 1 : vector<32x128xf32>, i32 -> vector<32x128xf32>
    %c127_i32_41 = arith.constant 127 : i32
    %143 = tpu.dynamic_rotate %136 by %c127_i32_41 dim 1 : vector<32x128xf32>, i32 -> vector<32x128xf32>
    %144 = arith.select %45, %143, %142 : vector<32x128xi1>, vector<32x128xf32>
    %145 = arith.select %49, %142, %143 : vector<32x128xi1>, vector<32x128xf32>
    %c1_i32_42 = arith.constant 1 : i32
    %146 = tpu.dynamic_rotate %137 by %c1_i32_42 dim 1 : vector<32x128xf32>, i32 -> vector<32x128xf32>
    %c127_i32_43 = arith.constant 127 : i32
    %147 = tpu.dynamic_rotate %137 by %c127_i32_43 dim 1 : vector<32x128xf32>, i32 -> vector<32x128xf32>
    %148 = arith.select %45, %147, %146 : vector<32x128xi1>, vector<32x128xf32>
    %149 = arith.select %49, %146, %147 : vector<32x128xi1>, vector<32x128xf32>
    %150 = arith.cmpf ogt, %96, %141 : vector<32x128xf32>
    %151 = arith.andi %117, %150 : vector<32x128xi1>
    %152 = arith.cmpf ogt, %96, %140 : vector<32x128xf32>
    %153 = arith.andi %151, %152 : vector<32x128xi1>
    %154 = arith.cmpf ogt, %96, %148 : vector<32x128xf32>
    %155 = arith.andi %121, %154 : vector<32x128xi1>
    %156 = arith.cmpf ogt, %96, %145 : vector<32x128xf32>
    %157 = arith.andi %155, %156 : vector<32x128xi1>
    %158 = arith.ori %153, %157 : vector<32x128xi1>
    %159 = arith.cmpf ogt, %96, %136 : vector<32x128xf32>
    %160 = arith.andi %129, %159 : vector<32x128xi1>
    %161 = arith.cmpf ogt, %96, %137 : vector<32x128xf32>
    %162 = arith.andi %160, %161 : vector<32x128xi1>
    %163 = arith.ori %158, %162 : vector<32x128xi1>
    %164 = arith.cmpf ogt, %96, %149 : vector<32x128xf32>
    %165 = arith.andi %133, %164 : vector<32x128xi1>
    %166 = arith.cmpf ogt, %96, %144 : vector<32x128xf32>
    %167 = arith.andi %165, %166 : vector<32x128xi1>
    %168 = arith.ori %163, %167 : vector<32x128xi1>
    %cst_44 = arith.constant 0.000000e+00 : f32
    %169 = vector.broadcast %cst_44 : f32 to vector<32x128xf32>
    %170 = arith.select %168, %96, %169 : vector<32x128xi1>, vector<32x128xf32>
    %171 = vector.extract_strided_slice %170 {offsets = [8, 0], sizes = [16, 128], strides = [1, 1]} : vector<32x128xf32> to vector<16x128xf32>
    %c0_45 = arith.constant 0 : index
    %c0_46 = arith.constant 0 : index
    %c0_47 = arith.constant 0 : index
    %172 = vector.load %arg5[%c0_45, %c0_46, %c0_47] : memref<1x16x128xf32, #tpu.memory_space<vmem>>, vector<1x16x128xf32>
    %173 = vector.shape_cast %172 : vector<1x16x128xf32> to vector<16x128xf32>
    %174 = vector.shape_cast %171 : vector<16x128xf32> to vector<1x16x128xf32>
    tpu.vector_store %arg5[%c0_45, %c0_46, %c0_47], %174 {strides = array<i32>} : memref<1x16x128xf32, #tpu.memory_space<vmem>>, vector<1x16x128xf32>,
    %c8_i32_48 = arith.constant 8 : i32
    %175 = vector.broadcast %c8_i32_48 : i32 to vector<32x128xi32>
    %176 = arith.cmpi sge, %7, %175 : vector<32x128xi32>
    %c24_i32 = arith.constant 24 : i32
    %177 = vector.broadcast %c24_i32 : i32 to vector<32x128xi32>
    %178 = arith.cmpi slt, %7, %177 : vector<32x128xi32>
    %179 = arith.andi %176, %178 : vector<32x128xi1>
    %c16_i32_49 = arith.constant 16 : i32
    %180 = vector.broadcast %c16_i32_49 : i32 to vector<32x128xi32>
    %181 = arith.cmpi slt, %12, %180 : vector<32x128xi32>
    %182 = arith.andi %179, %181 : vector<32x128xi1>
    %c16_i32_50 = arith.constant 16 : i32
    %183 = vector.broadcast %c16_i32_50 : i32 to vector<32x128xi32>
    %184 = arith.cmpi slt, %8, %183 : vector<32x128xi32>
    %185 = arith.andi %182, %184 : vector<32x128xi1>
    %cst_51 = arith.constant 0xFF800000 : f32
    %186 = vector.broadcast %cst_51 : f32 to vector<32x128xf32>
    %187 = arith.select %185, %170, %186 : vector<32x128xi1>, vector<32x128xf32>
    %188 = vector.shape_cast %187 : vector<32x128xf32> to vector<1x32x128xf32>
    %cst_52 = arith.constant dense<0xFF800000> : vector<1xf32>
    %189 = vector.multi_reduction <maximumf>, %188, %cst_52 [1, 2] : vector<1x32x128xf32> to vector<1xf32>
    %190 = vector.shape_cast %189 : vector<1xf32> to vector<1x1x1xf32>
    %191 = vector.extract %190[0, 0, 0] : f32 from vector<1x1x1xf32>
    %192 = vector.broadcast %191 : f32 to vector<1x1xf32>
    %c0_53 = arith.constant 0 : index
    %c0_54 = arith.constant 0 : index
    %c0_55 = arith.constant 0 : index
    %c0_56 = arith.constant 0 : index
    %193 = vector.load %arg6[%c0_53, %c0_54, %c0_55, %c0_56] : memref<1x1x1x1xf32, #tpu.memory_space<vmem>>, vector<1x1x1x1xf32>
    %194 = vector.shape_cast %193 : vector<1x1x1x1xf32> to vector<1x1xf32>
    %195 = vector.shape_cast %192 : vector<1x1xf32> to vector<1x1x1x1xf32>
    tpu.vector_store %arg6[%c0_53, %c0_54, %c0_55, %c0_56], %195 {strides = array<i32>} : memref<1x1x1x1xf32, #tpu.memory_space<vmem>>, vector<1x1x1x1xf32>,
    %cst_57 = arith.constant 0x7F800000 : f32
    %196 = vector.broadcast %cst_57 : f32 to vector<32x128xf32>
    %197 = arith.select %185, %170, %196 : vector<32x128xi1>, vector<32x128xf32>
    %198 = vector.shape_cast %197 : vector<32x128xf32> to vector<1x32x128xf32>
    %cst_58 = arith.constant dense<0x7F800000> : vector<1xf32>
    %199 = vector.multi_reduction <minimumf>, %198, %cst_58 [1, 2] : vector<1x32x128xf32> to vector<1xf32>
    %200 = vector.shape_cast %199 : vector<1xf32> to vector<1x1x1xf32>
    %201 = vector.extract %200[0, 0, 0] : f32 from vector<1x1x1xf32>
    %202 = vector.broadcast %201 : f32 to vector<1x1xf32>
    %c0_59 = arith.constant 0 : index
    %c0_60 = arith.constant 0 : index
    %c0_61 = arith.constant 0 : index
    %c0_62 = arith.constant 0 : index
    %203 = vector.load %arg7[%c0_59, %c0_60, %c0_61, %c0_62] : memref<1x1x1x1xf32, #tpu.memory_space<vmem>>, vector<1x1x1x1xf32>
    %204 = vector.shape_cast %203 : vector<1x1x1x1xf32> to vector<1x1xf32>
    %205 = vector.shape_cast %202 : vector<1x1xf32> to vector<1x1x1x1xf32>
    tpu.vector_store %arg7[%c0_59, %c0_60, %c0_61, %c0_62], %205 {strides = array<i32>} : memref<1x1x1x1xf32, #tpu.memory_space<vmem>>, vector<1x1x1x1xf32>,
    return
  }
  func.func @transform_0(%arg0: i32, %arg1: i32) -> (i32, i32, i32) {
    %c2_i32 = arith.constant 2 : i32
    %0 = arith.muli %arg1, %c2_i32 : i32
    %c1_i32 = arith.constant 1 : i32
    %1 = arith.subi %0, %c1_i32 : i32
    %c0_i32 = arith.constant 0 : i32
    %2 = arith.maxsi %1, %c0_i32 : i32
    %c0_i32_0 = arith.constant 0 : i32
    %c0_i32_1 = arith.constant 0 : i32
    return %arg0, %2, %c0_i32_0 : i32, i32, i32
  }
  func.func @transform_1(%arg0: i32, %arg1: i32) -> (i32, i32, i32) {
    %c0_i32 = arith.constant 0 : i32
    %c0_i32_0 = arith.constant 0 : i32
    return %arg0, %arg1, %c0_i32 : i32, i32, i32
  }
  func.func @transform_2(%arg0: i32, %arg1: i32) -> (i32, i32, i32) {
    %c1_i32 = arith.constant 1 : i32
    %0 = arith.addi %arg1, %c1_i32 : i32
    %c2_i32 = arith.constant 2 : i32
    %1 = arith.muli %0, %c2_i32 : i32
    %c1_i32_0 = arith.constant 1 : i32
    %2 = arith.minsi %1, %c1_i32_0 : i32
    %c0_i32 = arith.constant 0 : i32
    %c0_i32_1 = arith.constant 0 : i32
    return %arg0, %2, %c0_i32 : i32, i32, i32
  }
  func.func @transform_3(%arg0: i32, %arg1: i32) -> (i32, i32, i32) {
    %c0_i32 = arith.constant 0 : i32
    %c0_i32_0 = arith.constant 0 : i32
    return %arg0, %arg1, %c0_i32 : i32, i32, i32
  }
  func.func @transform_4(%arg0: i32, %arg1: i32) -> (i32, i32, i32, i32) {
    %c0_i32 = arith.constant 0 : i32
    %c0_i32_0 = arith.constant 0 : i32
    %c0_i32_1 = arith.constant 0 : i32
    return %arg0, %arg1, %c0_i32, %c0_i32_0 : i32, i32, i32, i32
  }
  func.func @transform_5(%arg0: i32, %arg1: i32) -> (i32, i32, i32, i32) {
    %c0_i32 = arith.constant 0 : i32
    %c0_i32_0 = arith.constant 0 : i32
    %c0_i32_1 = arith.constant 0 : i32
    return %arg0, %arg1, %c0_i32, %c0_i32_0 : i32, i32, i32, i32
  }
}

module attributes {stable_mosaic.version = 11 : i64} {
  func.func @_canny_pass2_kernel(%arg0: i32, %arg1: memref<2xf32, #tpu.memory_space<smem>>, %arg2: memref<1x16x128xf32, #tpu.memory_space<vmem>>, %arg3: memref<1x16x16xf32, #tpu.memory_space<vmem>>) attributes {dimension_semantics = [#tpu.dimension_semantics<parallel>], iteration_bounds = array<i64: 2>, scalar_prefetch = 1 : i64, scratch_operands = 0 : i64, tpu.core_type = #tpu.core_type<tc>, window_params = [{transform_indices = @transform_0, window_bounds = array<i64: 1, 16, 128>}, {transform_indices = @transform_1, window_bounds = array<i64: 1, 16, 16>}]} {
    %c0 = arith.constant 0 : index
    %c0_0 = arith.constant 0 : index
    %c0_1 = arith.constant 0 : index
    %0 = vector.load %arg2[%c0, %c0_0, %c0_1] : memref<1x16x128xf32, #tpu.memory_space<vmem>>, vector<1x16x128xf32>
    %1 = vector.shape_cast %0 : vector<1x16x128xf32> to vector<16x128xf32>
    %c0_2 = arith.constant 0 : index
    %2 = memref.load %arg1[%c0_2] : memref<2xf32, #tpu.memory_space<smem>>
    %c1 = arith.constant 1 : index
    %3 = memref.load %arg1[%c1] : memref<2xf32, #tpu.memory_space<smem>>
    %4 = tpu.iota {dimensions = array<i32: 0>} : vector<16x128xi32>
    %5 = tpu.iota {dimensions = array<i32: 1>} : vector<16x128xi32>
    %6 = vector.broadcast %3 : f32 to vector<16x128xf32>
    %7 = arith.cmpf oge, %1, %6 : vector<16x128xf32>
    %8 = vector.broadcast %2 : f32 to vector<16x128xf32>
    %9 = arith.cmpf oge, %1, %8 : vector<16x128xf32>
    %10 = vector.broadcast %3 : f32 to vector<16x128xf32>
    %11 = arith.cmpf olt, %1, %10 : vector<16x128xf32>
    %12 = arith.andi %9, %11 : vector<16x128xi1>
    %cst = arith.constant 1.000000e+00 : f32
    %cst_3 = arith.constant 0.000000e+00 : f32
    %13 = vector.broadcast %cst : f32 to vector<16x128xf32>
    %14 = vector.broadcast %cst_3 : f32 to vector<16x128xf32>
    %15 = arith.select %7, %13, %14 : vector<16x128xi1>, vector<16x128xf32>
    %c1_i32 = arith.constant 1 : i32
    %16 = tpu.dynamic_rotate %15 by %c1_i32 dim 0 : vector<16x128xf32>, i32 -> vector<16x128xf32>
    %c0_i32 = arith.constant 0 : i32
    %17 = vector.broadcast %c0_i32 : i32 to vector<16x128xi32>
    %18 = arith.cmpi eq, %4, %17 : vector<16x128xi32>
    %c15_i32 = arith.constant 15 : i32
    %19 = tpu.dynamic_rotate %15 by %c15_i32 dim 0 : vector<16x128xf32>, i32 -> vector<16x128xf32>
    %20 = arith.select %18, %19, %16 : vector<16x128xi1>, vector<16x128xf32>
    %c15_i32_4 = arith.constant 15 : i32
    %21 = vector.broadcast %c15_i32_4 : i32 to vector<16x128xi32>
    %22 = arith.cmpi eq, %4, %21 : vector<16x128xi32>
    %23 = arith.select %22, %16, %19 : vector<16x128xi1>, vector<16x128xf32>
    %24 = arith.maximumf %20, %23 : vector<16x128xf32>
    %25 = arith.maximumf %15, %24 : vector<16x128xf32>
    %c1_i32_5 = arith.constant 1 : i32
    %26 = tpu.dynamic_rotate %15 by %c1_i32_5 dim 1 : vector<16x128xf32>, i32 -> vector<16x128xf32>
    %c0_i32_6 = arith.constant 0 : i32
    %27 = vector.broadcast %c0_i32_6 : i32 to vector<16x128xi32>
    %28 = arith.cmpi eq, %5, %27 : vector<16x128xi32>
    %c127_i32 = arith.constant 127 : i32
    %29 = tpu.dynamic_rotate %15 by %c127_i32 dim 1 : vector<16x128xf32>, i32 -> vector<16x128xf32>
    %30 = arith.select %28, %29, %26 : vector<16x128xi1>, vector<16x128xf32>
    %31 = arith.maximumf %25, %30 : vector<16x128xf32>
    %c15_i32_7 = arith.constant 15 : i32
    %32 = vector.broadcast %c15_i32_7 : i32 to vector<16x128xi32>
    %33 = arith.cmpi eq, %5, %32 : vector<16x128xi32>
    %34 = arith.select %33, %26, %29 : vector<16x128xi1>, vector<16x128xf32>
    %35 = arith.maximumf %31, %34 : vector<16x128xf32>
    %c1_i32_8 = arith.constant 1 : i32
    %36 = tpu.dynamic_rotate %20 by %c1_i32_8 dim 1 : vector<16x128xf32>, i32 -> vector<16x128xf32>
    %c127_i32_9 = arith.constant 127 : i32
    %37 = tpu.dynamic_rotate %20 by %c127_i32_9 dim 1 : vector<16x128xf32>, i32 -> vector<16x128xf32>
    %38 = arith.select %28, %37, %36 : vector<16x128xi1>, vector<16x128xf32>
    %39 = arith.maximumf %35, %38 : vector<16x128xf32>
    %40 = arith.select %33, %36, %37 : vector<16x128xi1>, vector<16x128xf32>
    %41 = arith.maximumf %39, %40 : vector<16x128xf32>
    %c1_i32_10 = arith.constant 1 : i32
    %42 = tpu.dynamic_rotate %23 by %c1_i32_10 dim 1 : vector<16x128xf32>, i32 -> vector<16x128xf32>
    %c127_i32_11 = arith.constant 127 : i32
    %43 = tpu.dynamic_rotate %23 by %c127_i32_11 dim 1 : vector<16x128xf32>, i32 -> vector<16x128xf32>
    %44 = arith.select %28, %43, %42 : vector<16x128xi1>, vector<16x128xf32>
    %45 = arith.maximumf %41, %44 : vector<16x128xf32>
    %46 = arith.select %33, %42, %43 : vector<16x128xi1>, vector<16x128xf32>
    %47 = arith.maximumf %45, %46 : vector<16x128xf32>
    %cst_12 = arith.constant 0.000000e+00 : f32
    %48 = vector.broadcast %cst_12 : f32 to vector<16x128xf32>
    %49 = arith.cmpf ogt, %47, %48 : vector<16x128xf32>
    %50 = arith.andi %12, %49 : vector<16x128xi1>
    %51 = arith.ori %7, %50 : vector<16x128xi1>
    %cst_13 = arith.constant 0.000000e+00 : f32
    %52 = vector.broadcast %cst_13 : f32 to vector<16x128xf32>
    %53 = arith.select %51, %1, %52 : vector<16x128xi1>, vector<16x128xf32>
    %54 = vector.extract_strided_slice %53 {offsets = [0, 0], sizes = [16, 16], strides = [1, 1]} : vector<16x128xf32> to vector<16x16xf32>
    %c0_14 = arith.constant 0 : index
    %c0_15 = arith.constant 0 : index
    %c0_16 = arith.constant 0 : index
    %55 = vector.load %arg3[%c0_14, %c0_15, %c0_16] : memref<1x16x16xf32, #tpu.memory_space<vmem>>, vector<1x16x16xf32>
    %56 = vector.shape_cast %55 : vector<1x16x16xf32> to vector<16x16xf32>
    %57 = vector.shape_cast %54 : vector<16x16xf32> to vector<1x16x16xf32>
    tpu.vector_store %arg3[%c0_14, %c0_15, %c0_16], %57 {strides = array<i32>} : memref<1x16x16xf32, #tpu.memory_space<vmem>>, vector<1x16x16xf32>,
    return
  }
  func.func @transform_0(%arg0: i32, %arg1: memref<2xf32, #tpu.memory_space<smem>>) -> (i32, i32, i32) {
    %c0_i32 = arith.constant 0 : i32
    %c0_i32_0 = arith.constant 0 : i32
    %c0_i32_1 = arith.constant 0 : i32
    return %arg0, %c0_i32, %c0_i32_0 : i32, i32, i32
  }
  func.func @transform_1(%arg0: i32, %arg1: memref<2xf32, #tpu.memory_space<smem>>) -> (i32, i32, i32) {
    %c0_i32 = arith.constant 0 : i32
    %c0_i32_0 = arith.constant 0 : i32
    %c0_i32_1 = arith.constant 0 : i32
    return %arg0, %c0_i32, %c0_i32_0 : i32, i32, i32
  }
}

</mosaic_0001>

<llo_original>
// kernel: canny_edge_detector.3
$region0: #{canny_edge_detector.3}
  #allocation0 [shape = 'u32[]', space=smem, size = 0x4, offset = 0x4, fixed_abs, tag = 'smem constant byte address 0x4 - core index']
  #allocation1 [shape = 'u32[72,128]{1,0:T(1,128)}', space=vmem, size = 0x9000, scoped, tag = 'internal scratch']
  #allocation2 [shape = 's32[1]{0}', space=sflag, size = 0x4, scoped, tag = 'scoped memory for canny_edge_detector.3']
  #allocation3 [shape = 'u8[512]{0}', space=smem, size = 0x200, scoped, tag = 'prefetched SMEM operand 0']
  %s0 = inlined_call_operand.vmem [shape: f32[2], index: 0, kind: input, shape index: {}]
  %s1 = inlined_call_operand.vmem [shape: f32[2,16,128], index: 1, kind: input, shape index: {}]
  %s2 = inlined_call_operand.hbm [shape: f32[2,16,16], index: 2, kind: output, shape index: {}]
  %s3 = sld [smem:[#allocation0]]
  $region37: #{canny_edge_detector.3} parent=0
    _
  %s5 = ssub.s32 1, %s3
  %s6 = scalar_select 0, %s5, %s3
  %s8 = sshll.u32 %s0, 4
  %s9 = int_to_ptr.vmem [resolvable:$true] %s8
  %11 = dma.vmem_to_smem %s9, 16, [#allocation3], [#allocation2]
  %13 = dma.done [#allocation2], 16
  %14 = sfence
  $region1: #{canny_edge_detector.3} parent=0
    #allocation4 [shape = 'u8[16384]{0}', space=vmem, size = 0x4000, scoped, tag = 'output window, operand 0']
    #allocation5 [shape = 's32[2]{0}', space=sflag, size = 0x8, scoped, tag = 'scoped memory for canny_edge_detector.3']
    %15 = vsyncpa [#allocation5], 0
    %s16 = scalar_lea.sflag [#allocation5], 1
    %17 = vsyncpa %s16, 0
    loop: start=0, step=1, limit=4
    $region2: #{canny_edge_detector.3} parent=1 // loop_pre_header
      _
    $region3: #{canny_edge_detector.3} parent=1 // loop_header
      %s19 = sphi 0, %s23
      %p20 = scmp.ge.s32.totalorder %s19, 4
      %s29 = sphi 0, %s31
      %s32 = sphi 0, %s29
      %s33 = sphi 0, %s32
      %s49 = sphi 0, %s33
      %s55 = sphi 0, %s57
      %s58 = sphi 0, %s55
      %s59 = sphi 0, %s58
      %s75 = sphi 0, %s59
    $region4: #{canny_edge_detector.3} parent=1 // loop_header_branch
      %22 = sbr.rel (%p20) target = $region8
    $region5: #{canny_edge_detector.3} parent=1 // loop_body
      %s24 = ssub.s32 %s19, 1
      %s25 = ssub.s32 %s19, 2
      %s26 = sadd.s32 %s19, 1
      %s27 = ssub.s32 %s19, %s26
      %p28 = scmp.eq.s32.totalorder %s27, 0
      %s30 = sadd.s32 %s29, 1
      %s31 = scalar_select %p28, %s29, %s30
      %p34 = pneg %p28
      %p35 = scmp.eq.s32.totalorder %s19, 1
      %p36 = por %p34, %p35
      %p37 = scmp.ne.s32.totalorder %s29, %s32
      %p38 = scmp.eq.s32.totalorder %s19, 0
      %p39 = por %p37, %p38
      %p40 = scmp.ne.s32.totalorder %s29, %s32
      %p41 = scmp.eq.s32.totalorder %s24, 1
      %p42 = por %p40, %p41
      %p43 = scmp.ne.s32.totalorder %s32, %s33
      %p44 = scmp.eq.s32.totalorder %s24, 0
      %p45 = por %p43, %p44
      %p46 = scmp.ne.s32.totalorder %s32, %s33
      %p47 = scmp.eq.s32.totalorder %s25, 1
      %p48 = por %p46, %p47
      %p50 = scmp.ne.s32.totalorder %s33, %s49
      %p51 = scmp.eq.s32.totalorder %s25, 0
      %p52 = por %p50, %p51
      %s53 = ssub.s32 %s19, %s26
      %p54 = scmp.eq.s32.totalorder %s53, 0
      %s56 = sadd.s32 %s55, 1
      %s57 = scalar_select %p54, %s55, %s56
      %p60 = pneg %p54
      %p61 = scmp.eq.s32.totalorder %s19, 1
      %p62 = por %p60, %p61
      %p63 = scmp.ne.s32.totalorder %s55, %s58
      %p64 = scmp.eq.s32.totalorder %s19, 0
      %p65 = por %p63, %p64
      %p66 = scmp.ne.s32.totalorder %s55, %s58
      %p67 = scmp.eq.s32.totalorder %s24, 1
      %p68 = por %p66, %p67
      %p69 = scmp.ne.s32.totalorder %s58, %s59
      %p70 = scmp.eq.s32.totalorder %s24, 0
      %p71 = por %p69, %p70
      %p72 = scmp.ne.s32.totalorder %s58, %s59
      %p73 = scmp.eq.s32.totalorder %s25, 1
      %p74 = por %p72, %p73
      %p76 = scmp.ne.s32.totalorder %s59, %s75
      %p77 = scmp.eq.s32.totalorder %s25, 0
      %p78 = por %p76, %p77
      %p79 = scmp.le.s32.totalorder 1, %s19
      %p80 = scmp.lt.s32.totalorder %s19, 3
      %p81 = pnand %p79, %p80
      %p82 = pneg %p81
      // Predicated region
      $region9: #{canny_edge_detector.3} parent=5 // pred_check
        _
      $region10: #{canny_edge_detector.3} parent=5 // pred_check_branch
        %84 = sbr.rel (%p81) target = $region12
      $region11: #{canny_edge_detector.3} parent=5 // pred_region
        %s85 = ssub.s32 %s19, 1
      $region12: #{canny_edge_detector.3} parent=5 // pred_fallthru
        _
      %p86 = scmp.lt.s32.totalorder %s19, 2
      // Predicated region
      $region13: #{canny_edge_detector.3} parent=5 // pred_check
        %p87 = pneg %p86
      $region14: #{canny_edge_detector.3} parent=5 // pred_check_branch
        %89 = sbr.rel (%p87) target = $region16
      $region15: #{canny_edge_detector.3} parent=5 // pred_region
        // Predicated region
        $region17: #{canny_edge_detector.3} parent=15 // pred_check
          %p90 = pneg %p39
        $region18: #{canny_edge_detector.3} parent=15 // pred_check_branch
          %92 = sbr.rel (%p90) target = $region20
        $region19: #{canny_edge_detector.3} parent=15 // pred_region
          %p93 = scmp.lt.s32.totalorder %s19, 1
          %s94 = scalar_select %p93, %s19, 1
          %s95 = smul.addr %s94, 2
          %s96 = smul.addr %s95, 8
          %s97 = scalar_lea.vmem %s1, %s96
        $region20: #{canny_edge_detector.3} parent=15 // pred_fallthru
          _
      $region16: #{canny_edge_detector.3} parent=5 // pred_fallthru
        _
      %p98 = scmp.le.s32.totalorder 1, %s19
      %p99 = scmp.lt.s32.totalorder %s19, 3
      %p100 = pnand %p98, %p99
      %p101 = pneg %p100
      // Predicated region
      $region21: #{canny_edge_detector.3} parent=5 // pred_check
        _
      $region22: #{canny_edge_detector.3} parent=5 // pred_check_branch
        %103 = sbr.rel (%p100) target = $region24
      $region23: #{canny_edge_detector.3} parent=5 // pred_region
        %s104 = ssub.s32 %s19, 1
        %p105 = scmp.lt.s32.totalorder %s24, 1
        %s106 = scalar_select %p105, %s24, 1
        %s107 = smul.addr %s106, 2
        %s108 = smul.addr %s107, 8
        %s109 = scalar_lea.vmem %s1, %s108
        %p110 = pneg %p45
        %p111 = pneg %p42
        %p112 = pneg %p71
        %p113 = pneg %p68
        %s114 = sand.u32 %s58, 1
        %s115 = scalar_lea.sflag [#allocation5], %s114
        %s116 = sand.u32 %s58, 1
        %s117 = smul.addr %s116, 16
        %s118 = scalar_lea.vmem [#allocation4], %s117
        %p119 = scmp.lt.s32.totalorder %s24, 1
        %s120 = scalar_select %p119, %s24, 1
        %s121 = smul.addr %s120, 2
        %s122 = smul.addr %s121, 8
        %s123 = scalar_lea.vmem %s1, %s122
        %v124 = vld [vmem:[%s123] sm:$0xff]
        %v125 = vld [vmem:[%s123 + $0x8] sm:$0xff]
        %s126 = sld [smem:[#allocation3]]
        %s127 = sld [smem:[#allocation3 + $0x1]]
        %v128 = vlaneseq
        %v129 = vshrl.u32 %v128, 7
        %v130 = vadd.s32 %v129, 8
        %v131 = vlaneseq
        %v132 = vand.u32 %v131, 127
        %v133 = vstv %s127
        %vm134 = vcmp.ge.f32.partialorder %v124, %v133
        %vm135 = vcmp.ge.f32.partialorder %v125, %v133
        %v136 = vstv %s126
        %vm137 = vcmp.ge.f32.partialorder %v124, %v136
        %vm138 = vcmp.ge.f32.partialorder %v125, %v136
        %vm139 = vcmp.lt.f32.partialorder %v124, %v133
        %vm140 = vcmp.lt.f32.partialorder %v125, %v133
        %vm141 = vmand %vm137, %vm139
        %vm142 = vmand %vm138, %vm140
        %v143 = vsel %vm134, 1.0, 0.0
        %v144 = vsel %vm135, 1.0, 0.0
        %v145 = vrot.slane %v143, 7
        %v146 = vrot.slane %v144, 7
        %vm147 = vcmp.lt.s32.totalorder %v129, 1
        %v148 = vsel %vm147, %v145, %v146
        %v149 = vsel %vm147, %v146, %v145
        %vm150 = vcmp.eq.s32.totalorder %v129, 0
        %vm151 = vcmp.eq.s32.totalorder %v130, 0
        %v152 = vrot.slane %v143, 1
        %v153 = vrot.slane %v144, 1
        %vm154 = vcmp.lt.s32.totalorder %v129, 7
        %v155 = vsel %vm154, %v152, %v153
        %v156 = vsel %vm154, %v153, %v152
        %v157 = vsel %vm150, %v155, %v149
        %v158 = vsel %vm151, %v156, %v148
        %vm159 = vcmp.eq.s32.totalorder %v129, 15
        %vm160 = vcmp.eq.s32.totalorder %v130, 15
        %v161 = vsel %vm159, %v149, %v155
        %v162 = vsel %vm160, %v148, %v156
        %v163 = vmax.f32 %v157, %v161
        %v164 = vmax.f32 %v158, %v162
        %v165 = vmax.f32 %v143, %v163
        %v166 = vmax.f32 %v144, %v164
        %167 = vrot.lane.b32.xlu0 %v143, 1
        %v168 = vpop.permute.xlu0 %167
        %169 = vrot.lane.b32.xlu0 %v144, 1
        %v170 = vpop.permute.xlu0 %169
        %vm171 = vcmp.eq.s32.totalorder %v132, 0
        %172 = vrot.lane.b32.xlu0 %v143, 127
        %v173 = vpop.permute.xlu0 %172
        %174 = vrot.lane.b32.xlu0 %v144, 127
        %v175 = vpop.permute.xlu0 %174
        %v176 = vsel %vm171, %v173, %v168
        %v177 = vsel %vm171, %v175, %v170
        %v178 = vmax.f32 %v165, %v176
        %v179 = vmax.f32 %v166, %v177
        %vm180 = vcmp.eq.s32.totalorder %v132, 15
        %v181 = vsel %vm180, %v168, %v173
        %v182 = vsel %vm180, %v170, %v175
        %v183 = vmax.f32 %v178, %v181
        %v184 = vmax.f32 %v179, %v182
        %185 = vrot.lane.b32.xlu0 %v157, 1
        %v186 = vpop.permute.xlu0 %185
        %187 = vrot.lane.b32.xlu0 %v158, 1
        %v188 = vpop.permute.xlu0 %187
        %189 = vrot.lane.b32.xlu0 %v157, 127
        %v190 = vpop.permute.xlu0 %189
        %191 = vrot.lane.b32.xlu0 %v158, 127
        %v192 = vpop.permute.xlu0 %191
        %v193 = vsel %vm171, %v190, %v186
        %v194 = vsel %vm171, %v192, %v188
        %v195 = vmax.f32 %v183, %v193
        %v196 = vmax.f32 %v184, %v194
        %v197 = vsel %vm180, %v186, %v190
        %v198 = vsel %vm180, %v188, %v192
        %v199 = vmax.f32 %v195, %v197
        %v200 = vmax.f32 %v196, %v198
        %201 = vrot.lane.b32.xlu0 %v161, 1
        %v202 = vpop.permute.xlu0 %201
        %203 = vrot.lane.b32.xlu0 %v162, 1
        %v204 = vpop.permute.xlu0 %203
        %205 = vrot.lane.b32.xlu0 %v161, 127
        %v206 = vpop.permute.xlu0 %205
        %207 = vrot.lane.b32.xlu0 %v162, 127
        %v208 = vpop.permute.xlu0 %207
        %v209 = vsel %vm171, %v206, %v202
        %v210 = vsel %vm171, %v208, %v204
        %v211 = vmax.f32 %v199, %v209
        %v212 = vmax.f32 %v200, %v210
        %v213 = vsel %vm180, %v202, %v206
        %v214 = vsel %vm180, %v204, %v208
        %v215 = vmax.f32 %v211, %v213
        %v216 = vmax.f32 %v212, %v214
        %vm217 = vcmp.gt.f32.partialorder %v215, 0.0
        %vm218 = vcmp.gt.f32.partialorder %v216, 0.0
        %vm219 = vmand %vm141, %vm217
        %vm220 = vmand %vm142, %vm218
        %vm221 = vmor %vm134, %vm219
        %vm222 = vmor %vm135, %vm220
        %v223 = vsel %vm221, %v124, 0.0
        %v224 = vsel %vm222, %v125, 0.0
        %vm225 = vcmask 130048
        %226 = vst.msk [vmem:[%s118] sm:$0xff] %vm225, %v223
        %227 = vst.msk [vmem:[%s118 + $0x8] sm:$0xff] %vm225, %v224
        %s228 = sand.u32 %s58, 1
        %s229 = scalar_lea.sflag [#allocation5], %s228
        %s230 = sand.u32 %s58, 1
        %s231 = smul.addr %s230, 16
        %s232 = scalar_lea.vmem [#allocation4], %s231
        // Predicated region
        $region25: #{canny_edge_detector.3} parent=23 // pred_check
          %p233 = pneg %p68
        $region26: #{canny_edge_detector.3} parent=23 // pred_check_branch
          %235 = sbr.rel (%p233) target = $region28
        $region27: #{canny_edge_detector.3} parent=23 // pred_region
          %237 = vsyncadd %s229, 0
          %s238 = smul.addr %s24, 2
          %s239 = smul.addr %s238, 8
          %s240 = scalar_lea.hbm %s2, %s239
          %s241 = sshll.u32 %s232, 4
          %s242 = int_to_ptr.vmem [resolvable:$true] %s241
          %s243 = sshll.u32 %s240, 4
          %s244 = int_to_ptr.hbm [resolvable:$true] %s243
          %249 = dma.vmem_to_hbm [thread:$0]  %s242, 256, %s244, %s229, 128, 128, 8
        $region28: #{canny_edge_detector.3} parent=23 // pred_fallthru
          _
      $region24: #{canny_edge_detector.3} parent=5 // pred_fallthru
        _
      %p250 = scmp.le.s32.totalorder 2, %s19
      // Predicated region
      $region29: #{canny_edge_detector.3} parent=5 // pred_check
        %p251 = pneg %p250
      $region30: #{canny_edge_detector.3} parent=5 // pred_check_branch
        %253 = sbr.rel (%p251) target = $region32
      $region31: #{canny_edge_detector.3} parent=5 // pred_region
        %s254 = ssub.s32 %s19, 2
        // Predicated region
        $region33: #{canny_edge_detector.3} parent=31 // pred_check
          %p255 = pneg %p74
        $region34: #{canny_edge_detector.3} parent=31 // pred_check_branch
          %257 = sbr.rel (%p255) target = $region36
        $region35: #{canny_edge_detector.3} parent=31 // pred_region
          %s258 = sand.u32 %s59, 1
          %s259 = scalar_lea.sflag [#allocation5], %s258
          %s260 = sand.u32 %s59, 1
          %s261 = smul.addr %s260, 16
          %s262 = scalar_lea.vmem [#allocation4], %s261
          %264 = dma.done %s259, 256
        $region36: #{canny_edge_detector.3} parent=31 // pred_fallthru
          _
      $region32: #{canny_edge_detector.3} parent=5 // pred_fallthru
        _
    $region6: #{canny_edge_detector.3} parent=1 // loop_footer
      %s23 = sadd.s32 1, %s19
    $region7: #{canny_edge_detector.3} parent=1 // loop_footer_branch
      %18 = sbr.rel target = $region3
    $region8: #{canny_edge_detector.3} parent=1 // loop_exit
      _
    %265 = vsyncpa [#allocation5], 1
    %s266 = scalar_lea.sflag [#allocation5], 1
    %267 = vsyncpa %s266, 1

// kernel: canny_edge_detector.2
$region0: #{canny_edge_detector.2}
  #allocation0 [shape = 'u32[]', space=smem, size = 0x4, offset = 0x4, fixed_abs, tag = 'smem constant byte address 0x4 - core index']
  #allocation1 [shape = 'u32[72,128]{1,0:T(1,128)}', space=vmem, size = 0x9000, scoped, tag = 'internal scratch']
  %s0 = inlined_call_operand.vmem [shape: f32[2,16,128], index: 0, kind: input, shape index: {}, may-alias: {0,1,2}]
  %s1 = inlined_call_operand.vmem [shape: f32[2,16,128], index: 1, kind: input, shape index: {}, may-alias: {0,1,2}]
  %s2 = inlined_call_operand.vmem [shape: f32[2,16,128], index: 2, kind: input, shape index: {}, may-alias: {0,1,2}]
  %s3 = inlined_call_operand.vmem [shape: f32[2,16,128], index: 3, kind: output, shape index: {0}]
  %s4 = inlined_call_operand.vmem [shape: f32[2,1,1,1], index: 4, kind: output, shape index: {1}]
  %s5 = inlined_call_operand.vmem [shape: f32[2,1,1,1], index: 5, kind: output, shape index: {2}]
  %6 = xla_tuple %s3, %s4, %s5
  %s7 = sld [smem:[#allocation0]]
  $region61: #{canny_edge_detector.2} parent=0
    _
  %s9 = ssub.s32 1, %s7
  %s10 = scalar_select 0, %s9, %s7
  loop: start=0, step=1, limit=4
  $region2: #{canny_edge_detector.2} parent=0 // loop_pre_header
    _
  $region3: #{canny_edge_detector.2} parent=0 // loop_header
    %s12 = sphi 0, %s16
    %p13 = scmp.ge.s32.totalorder %s12, 4
    %s19 = sphi 0, %s31
    %s20 = sphi 0, %s27
    %s21 = sphi 0, %s19
    %s22 = sphi 0, %s20
    %s23 = sphi 0, %s21
    %s24 = sphi 0, %s22
    %s44 = sphi 0, %s46
    %s47 = sphi 0, %s44
    %s48 = sphi 0, %s47
    %s64 = sphi 0, %s48
    %s72 = sphi 0, %s74
    %s75 = sphi 0, %s72
    %s76 = sphi 0, %s75
    %s92 = sphi 0, %s76
    %s108 = sphi 0, %s110
    %s111 = sphi 0, %s108
    %s112 = sphi 0, %s111
    %s128 = sphi 0, %s112
    %s136 = sphi 0, %s138
    %s139 = sphi 0, %s136
    %s140 = sphi 0, %s139
    %s156 = sphi 0, %s140
    %s164 = sphi 0, %s166
    %s167 = sphi 0, %s164
    %s168 = sphi 0, %s167
    %s184 = sphi 0, %s168
    %s192 = sphi 0, %s194
    %s195 = sphi 0, %s192
    %s196 = sphi 0, %s195
    %s212 = sphi 0, %s196
  $region4: #{canny_edge_detector.2} parent=0 // loop_header_branch
    %15 = sbr.rel (%p13) target = $region8
  $region5: #{canny_edge_detector.2} parent=0 // loop_body
    %s17 = ssub.s32 %s12, 1
    %s18 = ssub.s32 %s12, 2
    %s25 = sadd.s32 1, %s20
    %p26 = scmp.ge.s32.totalorder %s25, 1
    %s27 = scalar_select %p26, 0, %s25
    %s28 = sadd.s32 1, %s19
    %s29 = scalar_select %p26, %s28, %s19
    %p30 = scmp.ge.s32.totalorder %s29, 2
    %s31 = scalar_select %p30, 0, %s29
    %s32 = smul.u32 %s20, 2
    %s33 = ssub.s32 %s32, 1
    %p34 = scmp.gt.s32.totalorder %s33, 0
    %s35 = scalar_select %p34, %s33, 0
    %s36 = smul.u32 %s27, 2
    %s37 = ssub.s32 %s36, 1
    %p38 = scmp.gt.s32.totalorder %s37, 0
    %s39 = scalar_select %p38, %s37, 0
    %s40 = ssub.s32 %s19, %s31
    %s41 = ssub.s32 %s35, %s39
    %s42 = sor.u32 %s40, %s41
    %p43 = scmp.eq.s32.totalorder %s42, 0
    %s45 = sadd.s32 %s44, 1
    %s46 = scalar_select %p43, %s44, %s45
    %p49 = pneg %p43
    %p50 = scmp.eq.s32.totalorder %s12, 1
    %p51 = por %p49, %p50
    %p52 = scmp.ne.s32.totalorder %s44, %s47
    %p53 = scmp.eq.s32.totalorder %s12, 0
    %p54 = por %p52, %p53
    %p55 = scmp.ne.s32.totalorder %s44, %s47
    %p56 = scmp.eq.s32.totalorder %s17, 1
    %p57 = por %p55, %p56
    %p58 = scmp.ne.s32.totalorder %s47, %s48
    %p59 = scmp.eq.s32.totalorder %s17, 0
    %p60 = por %p58, %p59
    %p61 = scmp.ne.s32.totalorder %s47, %s48
    %p62 = scmp.eq.s32.totalorder %s18, 1
    %p63 = por %p61, %p62
    %p65 = scmp.ne.s32.totalorder %s48, %s64
    %p66 = scmp.eq.s32.totalorder %s18, 0
    %p67 = por %p65, %p66
    %s68 = ssub.s32 %s19, %s31
    %s69 = ssub.s32 %s20, %s27
    %s70 = sor.u32 %s68, %s69
    %p71 = scmp.eq.s32.totalorder %s70, 0
    %s73 = sadd.s32 %s72, 1
    %s74 = scalar_select %p71, %s72, %s73
    %p77 = pneg %p71
    %p78 = scmp.eq.s32.totalorder %s12, 1
    %p79 = por %p77, %p78
    %p80 = scmp.ne.s32.totalorder %s72, %s75
    %p81 = scmp.eq.s32.totalorder %s12, 0
    %p82 = por %p80, %p81
    %p83 = scmp.ne.s32.totalorder %s72, %s75
    %p84 = scmp.eq.s32.totalorder %s17, 1
    %p85 = por %p83, %p84
    %p86 = scmp.ne.s32.totalorder %s75, %s76
    %p87 = scmp.eq.s32.totalorder %s17, 0
    %p88 = por %p86, %p87
    %p89 = scmp.ne.s32.totalorder %s75, %s76
    %p90 = scmp.eq.s32.totalorder %s18, 1
    %p91 = por %p89, %p90
    %p93 = scmp.ne.s32.totalorder %s76, %s92
    %p94 = scmp.eq.s32.totalorder %s18, 0
    %p95 = por %p93, %p94
    %s96 = sadd.s32 %s20, 1
    %s97 = smul.u32 %s96, 2
    %p98 = scmp.lt.s32.totalorder %s97, 1
    %s99 = scalar_select %p98, %s97, 1
    %s100 = sadd.s32 %s27, 1
    %s101 = smul.u32 %s100, 2
    %p102 = scmp.lt.s32.totalorder %s101, 1
    %s103 = scalar_select %p102, %s101, 1
    %s104 = ssub.s32 %s19, %s31
    %s105 = ssub.s32 %s99, %s103
    %s106 = sor.u32 %s104, %s105
    %p107 = scmp.eq.s32.totalorder %s106, 0
    %s109 = sadd.s32 %s108, 1
    %s110 = scalar_select %p107, %s108, %s109
    %p113 = pneg %p107
    %p114 = scmp.eq.s32.totalorder %s12, 1
    %p115 = por %p113, %p114
    %p116 = scmp.ne.s32.totalorder %s108, %s111
    %p117 = scmp.eq.s32.totalorder %s12, 0
    %p118 = por %p116, %p117
    %p119 = scmp.ne.s32.totalorder %s108, %s111
    %p120 = scmp.eq.s32.totalorder %s17, 1
    %p121 = por %p119, %p120
    %p122 = scmp.ne.s32.totalorder %s111, %s112
    %p123 = scmp.eq.s32.totalorder %s17, 0
    %p124 = por %p122, %p123
    %p125 = scmp.ne.s32.totalorder %s111, %s112
    %p126 = scmp.eq.s32.totalorder %s18, 1
    %p127 = por %p125, %p126
    %p129 = scmp.ne.s32.totalorder %s112, %s128
    %p130 = scmp.eq.s32.totalorder %s18, 0
    %p131 = por %p129, %p130
    %s132 = ssub.s32 %s19, %s31
    %s133 = ssub.s32 %s20, %s27
    %s134 = sor.u32 %s132, %s133
    %p135 = scmp.eq.s32.totalorder %s134, 0
    %s137 = sadd.s32 %s136, 1
    %s138 = scalar_select %p135, %s136, %s137
    %p141 = pneg %p135
    %p142 = scmp.eq.s32.totalorder %s12, 1
    %p143 = por %p141, %p142
    %p144 = scmp.ne.s32.totalorder %s136, %s139
    %p145 = scmp.eq.s32.totalorder %s12, 0
    %p146 = por %p144, %p145
    %p147 = scmp.ne.s32.totalorder %s136, %s139
    %p148 = scmp.eq.s32.totalorder %s17, 1
    %p149 = por %p147, %p148
    %p150 = scmp.ne.s32.totalorder %s139, %s140
    %p151 = scmp.eq.s32.totalorder %s17, 0
    %p152 = por %p150, %p151
    %p153 = scmp.ne.s32.totalorder %s139, %s140
    %p154 = scmp.eq.s32.totalorder %s18, 1
    %p155 = por %p153, %p154
    %p157 = scmp.ne.s32.totalorder %s140, %s156
    %p158 = scmp.eq.s32.totalorder %s18, 0
    %p159 = por %p157, %p158
    %s160 = ssub.s32 %s19, %s31
    %s161 = ssub.s32 %s20, %s27
    %s162 = sor.u32 %s160, %s161
    %p163 = scmp.eq.s32.totalorder %s162, 0
    %s165 = sadd.s32 %s164, 1
    %s166 = scalar_select %p163, %s164, %s165
    %p169 = pneg %p163
    %p170 = scmp.eq.s32.totalorder %s12, 1
    %p171 = por %p169, %p170
    %p172 = scmp.ne.s32.totalorder %s164, %s167
    %p173 = scmp.eq.s32.totalorder %s12, 0
    %p174 = por %p172, %p173
    %p175 = scmp.ne.s32.totalorder %s164, %s167
    %p176 = scmp.eq.s32.totalorder %s17, 1
    %p177 = por %p175, %p176
    %p178 = scmp.ne.s32.totalorder %s167, %s168
    %p179 = scmp.eq.s32.totalorder %s17, 0
    %p180 = por %p178, %p179
    %p181 = scmp.ne.s32.totalorder %s167, %s168
    %p182 = scmp.eq.s32.totalorder %s18, 1
    %p183 = por %p181, %p182
    %p185 = scmp.ne.s32.totalorder %s168, %s184
    %p186 = scmp.eq.s32.totalorder %s18, 0
    %p187 = por %p185, %p186
    %s188 = ssub.s32 %s19, %s31
    %s189 = ssub.s32 %s20, %s27
    %s190 = sor.u32 %s188, %s189
    %p191 = scmp.eq.s32.totalorder %s190, 0
    %s193 = sadd.s32 %s192, 1
    %s194 = scalar_select %p191, %s192, %s193
    %p197 = pneg %p191
    %p198 = scmp.eq.s32.totalorder %s12, 1
    %p199 = por %p197, %p198
    %p200 = scmp.ne.s32.totalorder %s192, %s195
    %p201 = scmp.eq.s32.totalorder %s12, 0
    %p202 = por %p200, %p201
    %p203 = scmp.ne.s32.totalorder %s192, %s195
    %p204 = scmp.eq.s32.totalorder %s17, 1
    %p205 = por %p203, %p204
    %p206 = scmp.ne.s32.totalorder %s195, %s196
    %p207 = scmp.eq.s32.totalorder %s17, 0
    %p208 = por %p206, %p207
    %p209 = scmp.ne.s32.totalorder %s195, %s196
    %p210 = scmp.eq.s32.totalorder %s18, 1
    %p211 = por %p209, %p210
    %p213 = scmp.ne.s32.totalorder %s196, %s212
    %p214 = scmp.eq.s32.totalorder %s18, 0
    %p215 = por %p213, %p214
    %p216 = scmp.le.s32.totalorder 1, %s12
    %p217 = scmp.lt.s32.totalorder %s12, 3
    %p218 = pnand %p216, %p217
    %p219 = pneg %p218
    // Predicated region
    $region9: #{canny_edge_detector.2} parent=5 // pred_check
      _
    $region10: #{canny_edge_detector.2} parent=5 // pred_check_branch
      %221 = sbr.rel (%p218) target = $region12
    $region11: #{canny_edge_detector.2} parent=5 // pred_region
      %s222 = ssub.s32 %s12, 1
    $region12: #{canny_edge_detector.2} parent=5 // pred_fallthru
      _
    %p223 = scmp.lt.s32.totalorder %s12, 2
    // Predicated region
    $region13: #{canny_edge_detector.2} parent=5 // pred_check
      %p224 = pneg %p223
    $region14: #{canny_edge_detector.2} parent=5 // pred_check_branch
      %226 = sbr.rel (%p224) target = $region16
    $region15: #{canny_edge_detector.2} parent=5 // pred_region
      // Predicated region
      $region17: #{canny_edge_detector.2} parent=15 // pred_check
        %p227 = pneg %p54
      $region18: #{canny_edge_detector.2} parent=15 // pred_check_branch
        %229 = sbr.rel (%p227) target = $region20
      $region19: #{canny_edge_detector.2} parent=15 // pred_region
        %s230 = smul.u32 %s20, 2
        %s231 = ssub.s32 %s230, 1
        %p232 = scmp.gt.s32.totalorder %s231, 0
        %s233 = scalar_select %p232, %s231, 0
        %p234 = scmp.lt.s32.totalorder %s19, 1
        %s235 = scalar_select %p234, %s19, 1
        %p236 = scmp.lt.s32.totalorder %s233, 1
        %s237 = scalar_select %p236, %s233, 1
        %s238 = smul.addr %s235, 2
        %s239 = sadd.s32 %s237, %s238
        %s240 = smul.addr %s239, 8
        %s241 = scalar_lea.vmem %s0, %s240
        %s242 = smul.u32 %s20, 2
        %s243 = ssub.s32 %s242, 1
        %p244 = scmp.gt.s32.totalorder %s243, 0
        %s245 = scalar_select %p244, %s243, 0
      $region20: #{canny_edge_detector.2} parent=15 // pred_fallthru
        _
      // Predicated region
      $region21: #{canny_edge_detector.2} parent=15 // pred_check
        %p246 = pneg %p82
      $region22: #{canny_edge_detector.2} parent=15 // pred_check_branch
        %248 = sbr.rel (%p246) target = $region24
      $region23: #{canny_edge_detector.2} parent=15 // pred_region
        %s249 = smul.u32 2, %s20
        %p250 = scmp.lt.s32.totalorder %s19, 1
        %s251 = scalar_select %p250, %s19, 1
        %p252 = scmp.lt.s32.totalorder %s249, 1
        %s253 = scalar_select %p252, %s249, 1
        %s254 = smul.addr %s251, 2
        %s255 = sadd.s32 %s253, %s254
        %s256 = smul.addr %s255, 8
        %s257 = scalar_lea.vmem %s1, %s256
        %s258 = smul.u32 2, %s20
      $region24: #{canny_edge_detector.2} parent=15 // pred_fallthru
        _
      // Predicated region
      $region25: #{canny_edge_detector.2} parent=15 // pred_check
        %p259 = pneg %p118
      $region26: #{canny_edge_detector.2} parent=15 // pred_check_branch
        %261 = sbr.rel (%p259) target = $region28
      $region27: #{canny_edge_detector.2} parent=15 // pred_region
        %s262 = sadd.s32 %s20, 1
        %s263 = smul.u32 %s262, 2
        %p264 = scmp.lt.s32.totalorder %s263, 1
        %s265 = scalar_select %p264, %s263, 1
        %p266 = scmp.lt.s32.totalorder %s19, 1
        %s267 = scalar_select %p266, %s19, 1
        %p268 = scmp.lt.s32.totalorder %s265, 1
        %s269 = scalar_select %p268, %s265, 1
        %s270 = smul.addr %s267, 2
        %s271 = sadd.s32 %s269, %s270
        %s272 = smul.addr %s271, 8
        %s273 = scalar_lea.vmem %s2, %s272
        %s274 = sadd.s32 %s20, 1
        %s275 = smul.u32 %s274, 2
        %p276 = scmp.lt.s32.totalorder %s275, 1
        %s277 = scalar_select %p276, %s275, 1
      $region28: #{canny_edge_detector.2} parent=15 // pred_fallthru
        _
    $region16: #{canny_edge_detector.2} parent=5 // pred_fallthru
      _
    %p278 = scmp.le.s32.totalorder 1, %s12
    %p279 = scmp.lt.s32.totalorder %s12, 3
    %p280 = pnand %p278, %p279
    %p281 = pneg %p280
    // Predicated region
    $region29: #{canny_edge_detector.2} parent=5 // pred_check
      _
    $region30: #{canny_edge_detector.2} parent=5 // pred_check_branch
      %283 = sbr.rel (%p280) target = $region32
    $region31: #{canny_edge_detector.2} parent=5 // pred_region
      %s284 = ssub.s32 %s12, 1
      %s285 = smul.u32 %s22, 2
      %s286 = ssub.s32 %s285, 1
      %p287 = scmp.gt.s32.totalorder %s286, 0
      %s288 = scalar_select %p287, %s286, 0
      %p289 = scmp.lt.s32.totalorder %s21, 1
      %s290 = scalar_select %p289, %s21, 1
      %p291 = scmp.lt.s32.totalorder %s288, 1
      %s292 = scalar_select %p291, %s288, 1
      %s293 = smul.addr %s290, 2
      %s294 = sadd.s32 %s292, %s293
      %s295 = smul.addr %s294, 8
      %s296 = scalar_lea.vmem %s0, %s295
      %p297 = pneg %p60
      %p298 = pneg %p57
      %s299 = smul.u32 2, %s22
      %p300 = scmp.lt.s32.totalorder %s21, 1
      %s301 = scalar_select %p300, %s21, 1
      %p302 = scmp.lt.s32.totalorder %s299, 1
      %s303 = scalar_select %p302, %s299, 1
      %s304 = smul.addr %s301, 2
      %s305 = sadd.s32 %s303, %s304
      %s306 = smul.addr %s305, 8
      %s307 = scalar_lea.vmem %s1, %s306
      %p308 = pneg %p88
      %p309 = pneg %p85
      %s310 = sadd.s32 %s22, 1
      %s311 = smul.u32 %s310, 2
      %p312 = scmp.lt.s32.totalorder %s311, 1
      %s313 = scalar_select %p312, %s311, 1
      %p314 = scmp.lt.s32.totalorder %s21, 1
      %s315 = scalar_select %p314, %s21, 1
      %p316 = scmp.lt.s32.totalorder %s313, 1
      %s317 = scalar_select %p316, %s313, 1
      %s318 = smul.addr %s315, 2
      %s319 = sadd.s32 %s317, %s318
      %s320 = smul.addr %s319, 8
      %s321 = scalar_lea.vmem %s2, %s320
      %p322 = pneg %p124
      %p323 = pneg %p121
      %p324 = pneg %p152
      %p325 = pneg %p149
      %s326 = smul.u32 2, %s22
      %p327 = scmp.lt.s32.totalorder %s21, 1
      %s328 = scalar_select %p327, %s21, 1
      %p329 = scmp.lt.s32.totalorder %s326, 1
      %s330 = scalar_select %p329, %s326, 1
      %s331 = smul.addr %s328, 2
      %s332 = sadd.s32 %s330, %s331
      %s333 = smul.addr %s332, 8
      %s334 = scalar_lea.vmem %s3, %s333
      %p335 = pneg %p180
      %p336 = pneg %p177
      %p337 = scmp.lt.s32.totalorder %s21, 1
      %s338 = scalar_select %p337, %s21, 1
      %p339 = scmp.lt.s32.totalorder %s22, 0
      %s340 = scalar_select %p339, %s22, 0
      %s341 = sadd.s32 %s340, %s338
      %s342 = scalar_lea.vmem %s4, %s341
      %p343 = pneg %p208
      %p344 = pneg %p205
      %p345 = scmp.lt.s32.totalorder %s21, 1
      %s346 = scalar_select %p345, %s21, 1
      %p347 = scmp.lt.s32.totalorder %s22, 0
      %s348 = scalar_select %p347, %s22, 0
      %s349 = sadd.s32 %s348, %s346
      %s350 = scalar_lea.vmem %s5, %s349
      %s351 = smul.u32 %s22, 2
      %s352 = ssub.s32 %s351, 1
      %p353 = scmp.gt.s32.totalorder %s352, 0
      %s354 = scalar_select %p353, %s352, 0
      %p355 = scmp.lt.s32.totalorder %s21, 1
      %s356 = scalar_select %p355, %s21, 1
      %p357 = scmp.lt.s32.totalorder %s354, 1
      %s358 = scalar_select %p357, %s354, 1
      %s359 = smul.addr %s356, 2
      %s360 = sadd.s32 %s358, %s359
      %s361 = smul.addr %s360, 8
      %s362 = scalar_lea.vmem %s0, %s361
      %s363 = smul.u32 %s22, 2
      %s364 = ssub.s32 %s363, 1
      %p365 = scmp.gt.s32.totalorder %s364, 0
      %s366 = scalar_select %p365, %s364, 0
      %s367 = smul.u32 2, %s22
      %p368 = scmp.lt.s32.totalorder %s21, 1
      %s369 = scalar_select %p368, %s21, 1
      %p370 = scmp.lt.s32.totalorder %s367, 1
      %s371 = scalar_select %p370, %s367, 1
      %s372 = smul.addr %s369, 2
      %s373 = sadd.s32 %s371, %s372
      %s374 = smul.addr %s373, 8
      %s375 = scalar_lea.vmem %s1, %s374
      %s376 = smul.u32 2, %s22
      %s377 = sadd.s32 %s22, 1
      %s378 = smul.u32 %s377, 2
      %p379 = scmp.lt.s32.totalorder %s378, 1
      %s380 = scalar_select %p379, %s378, 1
      %p381 = scmp.lt.s32.totalorder %s21, 1
      %s382 = scalar_select %p381, %s21, 1
      %p383 = scmp.lt.s32.totalorder %s380, 1
      %s384 = scalar_select %p383, %s380, 1
      %s385 = smul.addr %s382, 2
      %s386 = sadd.s32 %s384, %s385
      %s387 = smul.addr %s386, 8
      %s388 = scalar_lea.vmem %s2, %s387
      %s389 = sadd.s32 %s22, 1
      %s390 = smul.u32 %s389, 2
      %p391 = scmp.lt.s32.totalorder %s390, 1
      %s392 = scalar_select %p391, %s390, 1
      %s393 = smul.u32 2, %s22
      %p394 = scmp.lt.s32.totalorder %s21, 1
      %s395 = scalar_select %p394, %s21, 1
      %p396 = scmp.lt.s32.totalorder %s393, 1
      %s397 = scalar_select %p396, %s393, 1
      %s398 = smul.addr %s395, 2
      %s399 = sadd.s32 %s397, %s398
      %s400 = smul.addr %s399, 8
      %s401 = scalar_lea.vmem %s3, %s400
      %s402 = smul.u32 2, %s22
      %p403 = scmp.lt.s32.totalorder %s21, 1
      %s404 = scalar_select %p403, %s21, 1
      %p405 = scmp.lt.s32.totalorder %s22, 0
      %s406 = scalar_select %p405, %s22, 0
      %s407 = sadd.s32 %s406, %s404
      %s408 = scalar_lea.vmem %s4, %s407
      %p409 = scmp.lt.s32.totalorder %s21, 1
      %s410 = scalar_select %p409, %s21, 1
      %p411 = scmp.lt.s32.totalorder %s22, 0
      %s412 = scalar_select %p411, %s22, 0
      %s413 = sadd.s32 %s412, %s410
      %s414 = scalar_lea.vmem %s5, %s413
      %v415 = vld [vmem:[%s362] sm:$0xff]
      %v416 = vld [vmem:[%s375] sm:$0xff]
      %v417 = vld [vmem:[%s375 + $0x8] sm:$0xff]
      %v418 = vld [vmem:[%s388] sm:$0xff]
      %v419 = vlaneseq
      %v420 = vshrl.u32 %v419, 7
      %v421 = vadd.s32 %v420, 8
      %v422 = vadd.s32 %v420, 16
      %v423 = vadd.s32 %v420, 24
      %v424 = vlaneseq
      %v425 = vand.u32 %v424, 127
      %s426 = smul.u32 %s22, 16
      %s427 = ssub.s32 %s426, 8
      %v428 = vstv %s427
      %v429 = vadd.s32 %v420, %v428
      %v430 = vadd.s32 %v421, %v428
      %v431 = vadd.s32 %v422, %v428
      %v432 = vadd.s32 %v423, %v428
      %v433 = vmul.f32 %v415, 0.40261996
      %v434 = vmul.f32 %v416, 0.40261996
      %v435 = vmul.f32 %v417, 0.40261996
      %v436 = vmul.f32 %v418, 0.40261996
      %v437 = vrot.slane %v415, 7
      %v438 = vrot.slane %v416, 7
      %v439 = vrot.slane %v417, 7
      %v440 = vrot.slane %v418, 7
      %vm441 = vcmp.lt.s32.totalorder %v420, 1
      %v442 = vsel %vm441, %v439, %v440
      %v443 = vsel %vm441, %v438, %v439
      %v444 = vsel %vm441, %v437, %v438
      %v445 = vsel %vm441, %v440, %v437
      %vm446 = vcmp.eq.s32.totalorder %v429, 0
      %vm447 = vcmp.eq.s32.totalorder %v430, 0
      %vm448 = vcmp.eq.s32.totalorder %v431, 0
      %vm449 = vcmp.eq.s32.totalorder %v432, 0
      %v450 = vrot.slane %v415, 1
      %v451 = vrot.slane %v416, 1
      %v452 = vrot.slane %v417, 1
      %v453 = vrot.slane %v418, 1
      %vm454 = vcmp.lt.s32.totalorder %v420, 7
      %v455 = vsel %vm454, %v452, %v453
      %v456 = vsel %vm454, %v451, %v452
      %v457 = vsel %vm454, %v450, %v451
      %v458 = vsel %vm454, %v453, %v450
      %v459 = vsel %vm446, %v457, %v445
      %v460 = vsel %vm447, %v456, %v444
      %v461 = vsel %vm448, %v455, %v443
      %v462 = vsel %vm449, %v458, %v442
      %vm463 = vcmp.eq.s32.totalorder %v429, 15
      %vm464 = vcmp.eq.s32.totalorder %v430, 15
      %vm465 = vcmp.eq.s32.totalorder %v431, 15
      %vm466 = vcmp.eq.s32.totalorder %v432, 15
      %v467 = vsel %vm463, %v445, %v457
      %v468 = vsel %vm464, %v444, %v456
      %v469 = vsel %vm465, %v443, %v455
      %v470 = vsel %vm466, %v442, %v458
      %v471 = vadd.f32 %v459, %v467
      %v472 = vadd.f32 %v460, %v468
      %v473 = vadd.f32 %v461, %v469
      %v474 = vadd.f32 %v462, %v470
      %v475 = vmul.f32 %v471, 0.24420136
      %v476 = vmul.f32 %v472, 0.24420136
      %v477 = vmul.f32 %v473, 0.24420136
      %v478 = vmul.f32 %v474, 0.24420136
      %v479 = vadd.f32 %v433, %v475
      %v480 = vadd.f32 %v434, %v476
      %v481 = vadd.f32 %v435, %v477
      %v482 = vadd.f32 %v436, %v478
      %v483 = vrot.slane %v415, 6
      %v484 = vrot.slane %v416, 6
      %v485 = vrot.slane %v417, 6
      %v486 = vrot.slane %v418, 6
      %vm487 = vcmp.lt.s32.totalorder %v420, 2
      %v488 = vsel %vm487, %v485, %v486
      %v489 = vsel %vm487, %v484, %v485
      %v490 = vsel %vm487, %v483, %v484
      %v491 = vsel %vm487, %v486, %v483
      %v492 = vrot.slane %v415, 2
      %v493 = vrot.slane %v416, 2
      %v494 = vrot.slane %v417, 2
      %v495 = vrot.slane %v418, 2
      %vm496 = vcmp.lt.s32.totalorder %v420, 6
      %v497 = vsel %vm496, %v494, %v495
      %v498 = vsel %vm496, %v493, %v494
      %v499 = vsel %vm496, %v492, %v493
      %v500 = vsel %vm496, %v495, %v492
      %v501 = vsel %vm446, %v499, %v491
      %v502 = vsel %vm447, %v498, %v490
      %v503 = vsel %vm448, %v497, %v489
      %v504 = vsel %vm449, %v500, %v488
      %vm505 = vcmp.eq.s32.totalorder %v429, 1
      %vm506 = vcmp.eq.s32.totalorder %v430, 1
      %vm507 = vcmp.eq.s32.totalorder %v431, 1
      %vm508 = vcmp.eq.s32.totalorder %v432, 1
      %v509 = vsel %vm505, %v415, %v501
      %v510 = vsel %vm506, %v416, %v502
      %v511 = vsel %vm507, %v417, %v503
      %v512 = vsel %vm508, %v418, %v504
      %vm513 = vcmp.eq.s32.totalorder %v429, 14
      %vm514 = vcmp.eq.s32.totalorder %v430, 14
      %vm515 = vcmp.eq.s32.totalorder %v431, 14
      %vm516 = vcmp.eq.s32.totalorder %v432, 14
      %v517 = vsel %vm513, %v415, %v499
      %v518 = vsel %vm514, %v416, %v498
      %v519 = vsel %vm515, %v417, %v497
      %v520 = vsel %vm516, %v418, %v500
      %v521 = vsel %vm463, %v491, %v517
      %v522 = vsel %vm464, %v490, %v518
      %v523 = vsel %vm465, %v489, %v519
      %v524 = vsel %vm466, %v488, %v520
      %v525 = vadd.f32 %v509, %v521
      %v526 = vadd.f32 %v510, %v522
      %v527 = vadd.f32 %v511, %v523
      %v528 = vadd.f32 %v512, %v524
      %v529 = vmul.f32 %v525, 0.05448869
      %v530 = vmul.f32 %v526, 0.05448869
      %v531 = vmul.f32 %v527, 0.05448869
      %v532 = vmul.f32 %v528, 0.05448869
      %v533 = vadd.f32 %v479, %v529
      %v534 = vadd.f32 %v480, %v530
      %v535 = vadd.f32 %v481, %v531
      %v536 = vadd.f32 %v482, %v532
      %v537 = vmul.f32 %v533, 0.40261996
      %v538 = vmul.f32 %v534, 0.40261996
      %v539 = vmul.f32 %v535, 0.40261996
      %v540 = vmul.f32 %v536, 0.40261996
      %541 = vrot.lane.b32.xlu0 %v533, 1
      %v542 = vpop.permute.xlu0 %541
      %543 = vrot.lane.b32.xlu0 %v534, 1
      %v544 = vpop.permute.xlu0 %543
      %545 = vrot.lane.b32.xlu0 %v535, 1
      %v546 = vpop.permute.xlu0 %545
      %547 = vrot.lane.b32.xlu0 %v536, 1
      %v548 = vpop.permute.xlu0 %547
      %vm549 = vcmp.eq.s32.totalorder %v425, 0
      %550 = vrot.lane.b32.xlu0 %v533, 127
      %v551 = vpop.permute.xlu0 %550
      %552 = vrot.lane.b32.xlu0 %v534, 127
      %v553 = vpop.permute.xlu0 %552
      %554 = vrot.lane.b32.xlu0 %v535, 127
      %v555 = vpop.permute.xlu0 %554
      %556 = vrot.lane.b32.xlu0 %v536, 127
      %v557 = vpop.permute.xlu0 %556
      %v558 = vsel %vm549, %v551, %v542
      %v559 = vsel %vm549, %v553, %v544
      %v560 = vsel %vm549, %v555, %v546
      %v561 = vsel %vm549, %v557, %v548
      %vm562 = vcmp.eq.s32.totalorder %v425, 15
      %v563 = vsel %vm562, %v542, %v551
      %v564 = vsel %vm562, %v544, %v553
      %v565 = vsel %vm562, %v546, %v555
      %v566 = vsel %vm562, %v548, %v557
      %v567 = vadd.f32 %v558, %v563
      %v568 = vadd.f32 %v559, %v564
      %v569 = vadd.f32 %v560, %v565
      %v570 = vadd.f32 %v561, %v566
      %v571 = vmul.f32 %v567, 0.24420136
      %v572 = vmul.f32 %v568, 0.24420136
      %v573 = vmul.f32 %v569, 0.24420136
      %v574 = vmul.f32 %v570, 0.24420136
      %v575 = vadd.f32 %v537, %v571
      %v576 = vadd.f32 %v538, %v572
      %v577 = vadd.f32 %v539, %v573
      %v578 = vadd.f32 %v540, %v574
      %579 = vrot.lane.b32.xlu0 %v533, 2
      %v580 = vpop.permute.xlu0 %579
      %581 = vrot.lane.b32.xlu0 %v534, 2
      %v582 = vpop.permute.xlu0 %581
      %583 = vrot.lane.b32.xlu0 %v535, 2
      %v584 = vpop.permute.xlu0 %583
      %585 = vrot.lane.b32.xlu0 %v536, 2
      %v586 = vpop.permute.xlu0 %585
      %587 = vrot.lane.b32.xlu0 %v533, 126
      %v588 = vpop.permute.xlu0 %587
      %589 = vrot.lane.b32.xlu0 %v534, 126
      %v590 = vpop.permute.xlu0 %589
      %591 = vrot.lane.b32.xlu0 %v535, 126
      %v592 = vpop.permute.xlu0 %591
      %593 = vrot.lane.b32.xlu0 %v536, 126
      %v594 = vpop.permute.xlu0 %593
      %v595 = vsel %vm549, %v588, %v580
      %v596 = vsel %vm549, %v590, %v582
      %v597 = vsel %vm549, %v592, %v584
      %v598 = vsel %vm549, %v594, %v586
      %vm599 = vcmp.eq.s32.totalorder %v425, 1
      %v600 = vsel %vm599, %v533, %v595
      %v601 = vsel %vm599, %v534, %v596
      %v602 = vsel %vm599, %v535, %v597
      %v603 = vsel %vm599, %v536, %v598
      %vm604 = vcmp.eq.s32.totalorder %v425, 14
      %v605 = vsel %vm604, %v533, %v588
      %v606 = vsel %vm604, %v534, %v590
      %v607 = vsel %vm604, %v535, %v592
      %v608 = vsel %vm604, %v536, %v594
      %v609 = vsel %vm562, %v580, %v605
      %v610 = vsel %vm562, %v582, %v606
      %v611 = vsel %vm562, %v584, %v607
      %v612 = vsel %vm562, %v586, %v608
      %v613 = vadd.f32 %v600, %v609
      %v614 = vadd.f32 %v601, %v610
      %v615 = vadd.f32 %v602, %v611
      %v616 = vadd.f32 %v603, %v612
      %v617 = vmul.f32 %v613, 0.05448869
      %v618 = vmul.f32 %v614, 0.05448869
      %v619 = vmul.f32 %v615, 0.05448869
      %v620 = vmul.f32 %v616, 0.05448869
      %v621 = vadd.f32 %v575, %v617
      %v622 = vadd.f32 %v576, %v618
      %v623 = vadd.f32 %v577, %v619
      %v624 = vadd.f32 %v578, %v620
      %v625 = vrot.slane %v621, 7
      %v626 = vrot.slane %v622, 7
      %v627 = vrot.slane %v623, 7
      %v628 = vrot.slane %v624, 7
      %v629 = vsel %vm441, %v627, %v628
      %v630 = vsel %vm441, %v626, %v627
      %v631 = vsel %vm441, %v625, %v626
      %v632 = vsel %vm441, %v628, %v625
      %v633 = vrot.slane %v621, 1
      %v634 = vrot.slane %v622, 1
      %v635 = vrot.slane %v623, 1
      %v636 = vrot.slane %v624, 1
      %v637 = vsel %vm454, %v635, %v636
      %v638 = vsel %vm454, %v634, %v635
      %v639 = vsel %vm454, %v633, %v634
      %v640 = vsel %vm454, %v636, %v633
      %v641 = vsel %vm446, %v639, %v632
      %v642 = vsel %vm447, %v638, %v631
      %v643 = vsel %vm448, %v637, %v630
      %v644 = vsel %vm449, %v640, %v629
      %v645 = vsel %vm463, %v632, %v639
      %v646 = vsel %vm464, %v631, %v638
      %v647 = vsel %vm465, %v630, %v637
      %v648 = vsel %vm466, %v629, %v640
      %v649 = vmul.f32 %v621, 2.0
      %v650 = vmul.f32 %v622, 2.0
      %v651 = vmul.f32 %v623, 2.0
      %v652 = vmul.f32 %v624, 2.0
      %v653 = vadd.f32 %v641, %v649
      %v654 = vadd.f32 %v642, %v650
      %v655 = vadd.f32 %v643, %v651
      %v656 = vadd.f32 %v644, %v652
      %v657 = vadd.f32 %v653, %v645
      %v658 = vadd.f32 %v654, %v646
      %v659 = vadd.f32 %v655, %v647
      %v660 = vadd.f32 %v656, %v648
      %v661 = vsub.f32 %v641, %v645
      %v662 = vsub.f32 %v642, %v646
      %v663 = vsub.f32 %v643, %v647
      %v664 = vsub.f32 %v644, %v648
      %665 = vrot.lane.b32.xlu0 %v657, 127
      %v666 = vpop.permute.xlu0 %665
      %667 = vrot.lane.b32.xlu0 %v658, 127
      %v668 = vpop.permute.xlu0 %667
      %669 = vrot.lane.b32.xlu0 %v659, 127
      %v670 = vpop.permute.xlu0 %669
      %671 = vrot.lane.b32.xlu0 %v660, 127
      %v672 = vpop.permute.xlu0 %671
      %673 = vrot.lane.b32.xlu0 %v657, 1
      %v674 = vpop.permute.xlu0 %673
      %675 = vrot.lane.b32.xlu0 %v658, 1
      %v676 = vpop.permute.xlu0 %675
      %677 = vrot.lane.b32.xlu0 %v659, 1
      %v678 = vpop.permute.xlu0 %677
      %679 = vrot.lane.b32.xlu0 %v660, 1
      %v680 = vpop.permute.xlu0 %679
      %v681 = vsel %vm562, %v674, %v666
      %v682 = vsel %vm562, %v676, %v668
      %v683 = vsel %vm562, %v678, %v670
      %v684 = vsel %vm562, %v680, %v672
      %v685 = vsel %vm549, %v666, %v674
      %v686 = vsel %vm549, %v668, %v676
      %v687 = vsel %vm549, %v670, %v678
      %v688 = vsel %vm549, %v672, %v680
      %v689 = vsub.f32 %v681, %v685
      %v690 = vsub.f32 %v682, %v686
      %v691 = vsub.f32 %v683, %v687
      %v692 = vsub.f32 %v684, %v688
      %693 = vrot.lane.b32.xlu0 %v661, 1
      %v694 = vpop.permute.xlu0 %693
      %695 = vrot.lane.b32.xlu0 %v662, 1
      %v696 = vpop.permute.xlu0 %695
      %697 = vrot.lane.b32.xlu0 %v663, 1
      %v698 = vpop.permute.xlu0 %697
      %699 = vrot.lane.b32.xlu0 %v664, 1
      %v700 = vpop.permute.xlu0 %699
      %701 = vrot.lane.b32.xlu0 %v661, 127
      %v702 = vpop.permute.xlu0 %701
      %703 = vrot.lane.b32.xlu0 %v662, 127
      %v704 = vpop.permute.xlu0 %703
      %705 = vrot.lane.b32.xlu0 %v663, 127
      %v706 = vpop.permute.xlu0 %705
      %707 = vrot.lane.b32.xlu0 %v664, 127
      %v708 = vpop.permute.xlu0 %707
      %v709 = vsel %vm549, %v702, %v694
      %v710 = vsel %vm549, %v704, %v696
      %v711 = vsel %vm549, %v706, %v698
      %v712 = vsel %vm549, %v708, %v700
      %v713 = vmul.f32 %v661, 2.0
      %v714 = vmul.f32 %v662, 2.0
      %v715 = vmul.f32 %v663, 2.0
      %v716 = vmul.f32 %v664, 2.0
      %v717 = vadd.f32 %v709, %v713
      %v718 = vadd.f32 %v710, %v714
      %v719 = vadd.f32 %v711, %v715
      %v720 = vadd.f32 %v712, %v716
      %v721 = vsel %vm562, %v694, %v702
      %v722 = vsel %vm562, %v696, %v704
      %v723 = vsel %vm562, %v698, %v706
      %v724 = vsel %vm562, %v700, %v708
      %v725 = vadd.f32 %v717, %v721
      %v726 = vadd.f32 %v718, %v722
      %v727 = vadd.f32 %v719, %v723
      %v728 = vadd.f32 %v720, %v724
      %v729 = vmul.f32 %v689, %v689
      %v730 = vmul.f32 %v690, %v690
      %v731 = vmul.f32 %v691, %v691
      %v732 = vmul.f32 %v692, %v692
      %v733 = vmul.f32 %v725, %v725
      %v734 = vmul.f32 %v726, %v726
      %v735 = vmul.f32 %v727, %v727
      %v736 = vmul.f32 %v728, %v728
      %v737 = vadd.f32 %v729, %v733
      %v738 = vadd.f32 %v730, %v734
      %v739 = vadd.f32 %v731, %v735
      %v740 = vadd.f32 %v732, %v736
      %v741 = vadd.f32 %v737, 1e-08
      %v742 = vadd.f32 %v738, 1e-08
      %v743 = vadd.f32 %v739, 1e-08
      %v744 = vadd.f32 %v740, 1e-08
      %v745 = vrsqrt.pop %v741
      %v746 = vmul.f32 %v745, %v741
      %v747 = vmul.f32 %v746, %v745
      %v748 = vmul.f32 0.5, %v747
      %v749 = vsub.f32 1.5, %v748
      %v750 = vmul.f32 %v745, %v749
      %v751 = vmul.f32 %v741, %v750
      %vm752 = vcmp.eq.f32.partialorder %v741, inf
      %v753 = vsel %vm752, %v741, %v751
      %vm754 = vcmp.eq.f32.partialorder %v741, 0.0
      %v755 = vand.u32 %v741, 2147483648
      %v756 = vsel %vm754, %v755, %v753
      %v757 = vrsqrt.pop %v742
      %v758 = vmul.f32 %v757, %v742
      %v759 = vmul.f32 %v758, %v757
      %v760 = vmul.f32 0.5, %v759
      %v761 = vsub.f32 1.5, %v760
      %v762 = vmul.f32 %v757, %v761
      %v763 = vmul.f32 %v742, %v762
      %vm764 = vcmp.eq.f32.partialorder %v742, inf
      %v765 = vsel %vm764, %v742, %v763
      %vm766 = vcmp.eq.f32.partialorder %v742, 0.0
      %v767 = vand.u32 %v742, 2147483648
      %v768 = vsel %vm766, %v767, %v765
      %v769 = vrsqrt.pop %v743
      %v770 = vmul.f32 %v769, %v743
      %v771 = vmul.f32 %v770, %v769
      %v772 = vmul.f32 0.5, %v771
      %v773 = vsub.f32 1.5, %v772
      %v774 = vmul.f32 %v769, %v773
      %v775 = vmul.f32 %v743, %v774
      %vm776 = vcmp.eq.f32.partialorder %v743, inf
      %v777 = vsel %vm776, %v743, %v775
      %vm778 = vcmp.eq.f32.partialorder %v743, 0.0
      %v779 = vand.u32 %v743, 2147483648
      %v780 = vsel %vm778, %v779, %v777
      %v781 = vrsqrt.pop %v744
      %v782 = vmul.f32 %v781, %v744
      %v783 = vmul.f32 %v782, %v781
      %v784 = vmul.f32 0.5, %v783
      %v785 = vsub.f32 1.5, %v784
      %v786 = vmul.f32 %v781, %v785
      %v787 = vmul.f32 %v744, %v786
      %vm788 = vcmp.eq.f32.partialorder %v744, inf
      %v789 = vsel %vm788, %v744, %v787
      %vm790 = vcmp.eq.f32.partialorder %v744, 0.0
      %v791 = vand.u32 %v744, 2147483648
      %v792 = vsel %vm790, %v791, %v789
      %v793 = vand.u32 2147483647, %v689
      %v794 = vand.u32 2147483647, %v690
      %v795 = vand.u32 2147483647, %v691
      %v796 = vand.u32 2147483647, %v692
      %v797 = vand.u32 2147483647, %v725
      %v798 = vand.u32 2147483647, %v726
      %v799 = vand.u32 2147483647, %v727
      %v800 = vand.u32 2147483647, %v728
      %v801 = vmul.f32 %v793, 0.41421357
      %v802 = vmul.f32 %v794, 0.41421357
      %v803 = vmul.f32 %v795, 0.41421357
      %v804 = vmul.f32 %v796, 0.41421357
      %v805 = vmul.f32 %v793, 2.4142137
      %v806 = vmul.f32 %v794, 2.4142137
      %v807 = vmul.f32 %v795, 2.4142137
      %v808 = vmul.f32 %v796, 2.4142137
      %v809 = vmul.f32 %v689, %v725
      %v810 = vmul.f32 %v690, %v726
      %v811 = vmul.f32 %v691, %v727
      %v812 = vmul.f32 %v692, %v728
      %vm813 = vcmp.gt.f32.partialorder %v809, 0.0
      %vm814 = vcmp.gt.f32.partialorder %v810, 0.0
      %vm815 = vcmp.gt.f32.partialorder %v811, 0.0
      %vm816 = vcmp.gt.f32.partialorder %v812, 0.0
      %vm817 = vcmp.lt.f32.partialorder %v809, 0.0
      %vm818 = vcmp.lt.f32.partialorder %v810, 0.0
      %vm819 = vcmp.lt.f32.partialorder %v811, 0.0
      %vm820 = vcmp.lt.f32.partialorder %v812, 0.0
      %vm821 = vcmp.eq.f32.partialorder %v725, 0.0
      %vm822 = vcmp.eq.f32.partialorder %v726, 0.0
      %vm823 = vcmp.eq.f32.partialorder %v727, 0.0
      %vm824 = vcmp.eq.f32.partialorder %v728, 0.0
      %vm825 = vcmp.eq.f32.partialorder %v689, 0.0
      %vm826 = vcmp.eq.f32.partialorder %v690, 0.0
      %vm827 = vcmp.eq.f32.partialorder %v691, 0.0
      %vm828 = vcmp.eq.f32.partialorder %v692, 0.0
      %vm829 = vcmp.lt.f32.partialorder %v797, %v801
      %vm830 = vcmp.lt.f32.partialorder %v798, %v802
      %vm831 = vcmp.lt.f32.partialorder %v799, %v803
      %vm832 = vcmp.lt.f32.partialorder %v800, %v804
      %vm833 = vmand %vm813, %vm829
      %vm834 = vmand %vm814, %vm830
      %vm835 = vmand %vm815, %vm831
      %vm836 = vmand %vm816, %vm832
      %vm837 = vmor %vm821, %vm833
      %vm838 = vmor %vm822, %vm834
      %vm839 = vmor %vm823, %vm835
      %vm840 = vmor %vm824, %vm836
      %vm841 = vcmp.le.f32.partialorder %v797, %v801
      %vm842 = vcmp.le.f32.partialorder %v798, %v802
      %vm843 = vcmp.le.f32.partialorder %v799, %v803
      %vm844 = vcmp.le.f32.partialorder %v800, %v804
      %vm845 = vmand %vm817, %vm841
      %vm846 = vmand %vm818, %vm842
      %vm847 = vmand %vm819, %vm843
      %vm848 = vmand %vm820, %vm844
      %vm849 = vmor %vm837, %vm845
      %vm850 = vmor %vm838, %vm846
      %vm851 = vmor %vm839, %vm847
      %vm852 = vmor %vm840, %vm848
      %vm853 = vcmp.ge.f32.partialorder %v797, %v801
      %vm854 = vcmp.ge.f32.partialorder %v798, %v802
      %vm855 = vcmp.ge.f32.partialorder %v799, %v803
      %vm856 = vcmp.ge.f32.partialorder %v800, %v804
      %vm857 = vmand %vm813, %vm853
      %vm858 = vmand %vm814, %vm854
      %vm859 = vmand %vm815, %vm855
      %vm860 = vmand %vm816, %vm856
      %vm861 = vcmp.lt.f32.partialorder %v797, %v805
      %vm862 = vcmp.lt.f32.partialorder %v798, %v806
      %vm863 = vcmp.lt.f32.partialorder %v799, %v807
      %vm864 = vcmp.lt.f32.partialorder %v800, %v808
      %vm865 = vmand %vm857, %vm861
      %vm866 = vmand %vm858, %vm862
      %vm867 = vmand %vm859, %vm863
      %vm868 = vmand %vm860, %vm864
      %vm869 = vmxor %vm821, 1
      %vm870 = vmxor %vm822, 1
      %vm871 = vmxor %vm823, 1
      %vm872 = vmxor %vm824, 1
      %vm873 = vmand %vm825, %vm869
      %vm874 = vmand %vm826, %vm870
      %vm875 = vmand %vm827, %vm871
      %vm876 = vmand %vm828, %vm872
      %vm877 = vcmp.ge.f32.partialorder %v797, %v805
      %vm878 = vcmp.ge.f32.partialorder %v798, %v806
      %vm879 = vcmp.ge.f32.partialorder %v799, %v807
      %vm880 = vcmp.ge.f32.partialorder %v800, %v808
      %vm881 = vmand %vm813, %vm877
      %vm882 = vmand %vm814, %vm878
      %vm883 = vmand %vm815, %vm879
      %vm884 = vmand %vm816, %vm880
      %vm885 = vmor %vm873, %vm881
      %vm886 = vmor %vm874, %vm882
      %vm887 = vmor %vm875, %vm883
      %vm888 = vmor %vm876, %vm884
      %vm889 = vcmp.gt.f32.partialorder %v797, %v805
      %vm890 = vcmp.gt.f32.partialorder %v798, %v806
      %vm891 = vcmp.gt.f32.partialorder %v799, %v807
      %vm892 = vcmp.gt.f32.partialorder %v800, %v808
      %vm893 = vmand %vm817, %vm889
      %vm894 = vmand %vm818, %vm890
      %vm895 = vmand %vm819, %vm891
      %vm896 = vmand %vm820, %vm892
      %vm897 = vmor %vm885, %vm893
      %vm898 = vmor %vm886, %vm894
      %vm899 = vmor %vm887, %vm895
      %vm900 = vmor %vm888, %vm896
      %vm901 = vcmp.gt.f32.partialorder %v797, %v801
      %vm902 = vcmp.gt.f32.partialorder %v798, %v802
      %vm903 = vcmp.gt.f32.partialorder %v799, %v803
      %vm904 = vcmp.gt.f32.partialorder %v800, %v804
      %vm905 = vmand %vm817, %vm901
      %vm906 = vmand %vm818, %vm902
      %vm907 = vmand %vm819, %vm903
      %vm908 = vmand %vm820, %vm904
      %vm909 = vcmp.le.f32.partialorder %v797, %v805
      %vm910 = vcmp.le.f32.partialorder %v798, %v806
      %vm911 = vcmp.le.f32.partialorder %v799, %v807
      %vm912 = vcmp.le.f32.partialorder %v800, %v808
      %vm913 = vmand %vm905, %vm909
      %vm914 = vmand %vm906, %vm910
      %vm915 = vmand %vm907, %vm911
      %vm916 = vmand %vm908, %vm912
      %v917 = vrot.slane %v756, 7
      %v918 = vrot.slane %v768, 7
      %v919 = vrot.slane %v780, 7
      %v920 = vrot.slane %v792, 7
      %v921 = vsel %vm441, %v919, %v920
      %v922 = vsel %vm441, %v918, %v919
      %v923 = vsel %vm441, %v917, %v918
      %v924 = vsel %vm441, %v920, %v917
      %v925 = vrot.slane %v756, 1
      %v926 = vrot.slane %v768, 1
      %v927 = vrot.slane %v780, 1
      %v928 = vrot.slane %v792, 1
      %v929 = vsel %vm454, %v927, %v928
      %v930 = vsel %vm454, %v926, %v927
      %v931 = vsel %vm454, %v925, %v926
      %v932 = vsel %vm454, %v928, %v925
      %v933 = vsel %vm446, %v931, %v924
      %v934 = vsel %vm447, %v930, %v923
      %v935 = vsel %vm448, %v929, %v922
      %v936 = vsel %vm449, %v932, %v921
      %v937 = vsel %vm463, %v924, %v931
      %v938 = vsel %vm464, %v923, %v930
      %v939 = vsel %vm465, %v922, %v929
      %v940 = vsel %vm466, %v921, %v932
      %941 = vrot.lane.b32.xlu0 %v756, 1
      %v942 = vpop.permute.xlu0 %941
      %943 = vrot.lane.b32.xlu0 %v768, 1
      %v944 = vpop.permute.xlu0 %943
      %945 = vrot.lane.b32.xlu0 %v780, 1
      %v946 = vpop.permute.xlu0 %945
      %947 = vrot.lane.b32.xlu0 %v792, 1
      %v948 = vpop.permute.xlu0 %947
      %949 = vrot.lane.b32.xlu0 %v756, 127
      %v950 = vpop.permute.xlu0 %949
      %951 = vrot.lane.b32.xlu0 %v768, 127
      %v952 = vpop.permute.xlu0 %951
      %953 = vrot.lane.b32.xlu0 %v780, 127
      %v954 = vpop.permute.xlu0 %953
      %955 = vrot.lane.b32.xlu0 %v792, 127
      %v956 = vpop.permute.xlu0 %955
      %v957 = vsel %vm549, %v950, %v942
      %v958 = vsel %vm549, %v952, %v944
      %v959 = vsel %vm549, %v954, %v946
      %v960 = vsel %vm549, %v956, %v948
      %v961 = vsel %vm562, %v942, %v950
      %v962 = vsel %vm562, %v944, %v952
      %v963 = vsel %vm562, %v946, %v954
      %v964 = vsel %vm562, %v948, %v956
      %965 = vrot.lane.b32.xlu0 %v933, 1
      %v966 = vpop.permute.xlu0 %965
      %967 = vrot.lane.b32.xlu0 %v934, 1
      %v968 = vpop.permute.xlu0 %967
      %969 = vrot.lane.b32.xlu0 %v935, 1
      %v970 = vpop.permute.xlu0 %969
      %971 = vrot.lane.b32.xlu0 %v936, 1
      %v972 = vpop.permute.xlu0 %971
      %973 = vrot.lane.b32.xlu0 %v933, 127
      %v974 = vpop.permute.xlu0 %973
      %975 = vrot.lane.b32.xlu0 %v934, 127
      %v976 = vpop.permute.xlu0 %975
      %977 = vrot.lane.b32.xlu0 %v935, 127
      %v978 = vpop.permute.xlu0 %977
      %979 = vrot.lane.b32.xlu0 %v936, 127
      %v980 = vpop.permute.xlu0 %979
      %v981 = vsel %vm549, %v974, %v966
      %v982 = vsel %vm549, %v976, %v968
      %v983 = vsel %vm549, %v978, %v970
      %v984 = vsel %vm549, %v980, %v972
      %v985 = vsel %vm562, %v966, %v974
      %v986 = vsel %vm562, %v968, %v976
      %v987 = vsel %vm562, %v970, %v978
      %v988 = vsel %vm562, %v972, %v980
      %989 = vrot.lane.b32.xlu0 %v937, 1
      %v990 = vpop.permute.xlu0 %989
      %991 = vrot.lane.b32.xlu0 %v938, 1
      %v992 = vpop.permute.xlu0 %991
      %993 = vrot.lane.b32.xlu0 %v939, 1
      %v994 = vpop.permute.xlu0 %993
      %995 = vrot.lane.b32.xlu0 %v940, 1
      %v996 = vpop.permute.xlu0 %995
      %997 = vrot.lane.b32.xlu0 %v937, 127
      %v998 = vpop.permute.xlu0 %997
      %999 = vrot.lane.b32.xlu0 %v938, 127
      %v1000 = vpop.permute.xlu0 %999
      %1001 = vrot.lane.b32.xlu0 %v939, 127
      %v1002 = vpop.permute.xlu0 %1001
      %1003 = vrot.lane.b32.xlu0 %v940, 127
      %v1004 = vpop.permute.xlu0 %1003
      %v1005 = vsel %vm549, %v998, %v990
      %v1006 = vsel %vm549, %v1000, %v992
      %v1007 = vsel %vm549, %v1002, %v994
      %v1008 = vsel %vm549, %v1004, %v996
      %v1009 = vsel %vm562, %v990, %v998
      %v1010 = vsel %vm562, %v992, %v1000
      %v1011 = vsel %vm562, %v994, %v1002
      %v1012 = vsel %vm562, %v996, %v1004
      %vm1013 = vcmp.gt.f32.partialorder %v756, %v961
      %vm1014 = vcmp.gt.f32.partialorder %v768, %v962
      %vm1015 = vcmp.gt.f32.partialorder %v780, %v963
      %vm1016 = vcmp.gt.f32.partialorder %v792, %v964
      %vm1017 = vmand %vm849, %vm1013
      %vm1018 = vmand %vm850, %vm1014
      %vm1019 = vmand %vm851, %vm1015
      %vm1020 = vmand %vm852, %vm1016
      %vm1021 = vcmp.gt.f32.partialorder %v756, %v957
      %vm1022 = vcmp.gt.f32.partialorder %v768, %v958
      %vm1023 = vcmp.gt.f32.partialorder %v780, %v959
      %vm1024 = vcmp.gt.f32.partialorder %v792, %v960
      %vm1025 = vmand %vm1017, %vm1021
      %vm1026 = vmand %vm1018, %vm1022
      %vm1027 = vmand %vm1019, %vm1023
      %vm1028 = vmand %vm1020, %vm1024
      %vm1029 = vcmp.gt.f32.partialorder %v756, %v1005
      %vm1030 = vcmp.gt.f32.partialorder %v768, %v1006
      %vm1031 = vcmp.gt.f32.partialorder %v780, %v1007
      %vm1032 = vcmp.gt.f32.partialorder %v792, %v1008
      %vm1033 = vmand %vm865, %vm1029
      %vm1034 = vmand %vm866, %vm1030
      %vm1035 = vmand %vm867, %vm1031
      %vm1036 = vmand %vm868, %vm1032
      %vm1037 = vcmp.gt.f32.partialorder %v756, %v985
      %vm1038 = vcmp.gt.f32.partialorder %v768, %v986
      %vm1039 = vcmp.gt.f32.partialorder %v780, %v987
      %vm1040 = vcmp.gt.f32.partialorder %v792, %v988
      %vm1041 = vmand %vm1033, %vm1037
      %vm1042 = vmand %vm1034, %vm1038
      %vm1043 = vmand %vm1035, %vm1039
      %vm1044 = vmand %vm1036, %vm1040
      %vm1045 = vmor %vm1025, %vm1041
      %vm1046 = vmor %vm1026, %vm1042
      %vm1047 = vmor %vm1027, %vm1043
      %vm1048 = vmor %vm1028, %vm1044
      %vm1049 = vcmp.gt.f32.partialorder %v756, %v933
      %vm1050 = vcmp.gt.f32.partialorder %v768, %v934
      %vm1051 = vcmp.gt.f32.partialorder %v780, %v935
      %vm1052 = vcmp.gt.f32.partialorder %v792, %v936
      %vm1053 = vmand %vm897, %vm1049
      %vm1054 = vmand %vm898, %vm1050
      %vm1055 = vmand %vm899, %vm1051
      %vm1056 = vmand %vm900, %vm1052
      %vm1057 = vcmp.gt.f32.partialorder %v756, %v937
      %vm1058 = vcmp.gt.f32.partialorder %v768, %v938
      %vm1059 = vcmp.gt.f32.partialorder %v780, %v939
      %vm1060 = vcmp.gt.f32.partialorder %v792, %v940
      %vm1061 = vmand %vm1053, %vm1057
      %vm1062 = vmand %vm1054, %vm1058
      %vm1063 = vmand %vm1055, %vm1059
      %vm1064 = vmand %vm1056, %vm1060
      %vm1065 = vmor %vm1045, %vm1061
      %vm1066 = vmor %vm1046, %vm1062
      %vm1067 = vmor %vm1047, %vm1063
      %vm1068 = vmor %vm1048, %vm1064
      %vm1069 = vcmp.gt.f32.partialorder %v756, %v1009
      %vm1070 = vcmp.gt.f32.partialorder %v768, %v1010
      %vm1071 = vcmp.gt.f32.partialorder %v780, %v1011
      %vm1072 = vcmp.gt.f32.partialorder %v792, %v1012
      %vm1073 = vmand %vm913, %vm1069
      %vm1074 = vmand %vm914, %vm1070
      %vm1075 = vmand %vm915, %vm1071
      %vm1076 = vmand %vm916, %vm1072
      %vm1077 = vcmp.gt.f32.partialorder %v756, %v981
      %vm1078 = vcmp.gt.f32.partialorder %v768, %v982
      %vm1079 = vcmp.gt.f32.partialorder %v780, %v983
      %vm1080 = vcmp.gt.f32.partialorder %v792, %v984
      %vm1081 = vmand %vm1073, %vm1077
      %vm1082 = vmand %vm1074, %vm1078
      %vm1083 = vmand %vm1075, %vm1079
      %vm1084 = vmand %vm1076, %vm1080
      %vm1085 = vmor %vm1065, %vm1081
      %vm1086 = vmor %vm1066, %vm1082
      %vm1087 = vmor %vm1067, %vm1083
      %vm1088 = vmor %vm1068, %vm1084
      %v1089 = vsel %vm1085, %v756, 0.0
      %v1090 = vsel %vm1086, %v768, 0.0
      %v1091 = vsel %vm1087, %v780, 0.0
      %v1092 = vsel %vm1088, %v792, 0.0
      %1093 = vst [vmem:[%s401] sm:$0xff] %v1090
      %1094 = vst [vmem:[%s401 + $0x8] sm:$0xff] %v1091
      %vm1095 = vcmp.ge.s32.totalorder %v420, 8
      %vm1096 = vcmp.ge.s32.totalorder %v421, 8
      %vm1097 = vcmp.ge.s32.totalorder %v422, 8
      %vm1098 = vcmp.ge.s32.totalorder %v423, 8
      %vm1099 = vcmp.lt.s32.totalorder %v420, 24
      %vm1100 = vcmp.lt.s32.totalorder %v421, 24
      %vm1101 = vcmp.lt.s32.totalorder %v422, 24
      %vm1102 = vcmp.lt.s32.totalorder %v423, 24
      %vm1103 = vmand %vm1095, %vm1099
      %vm1104 = vmand %vm1096, %vm1100
      %vm1105 = vmand %vm1097, %vm1101
      %vm1106 = vmand %vm1098, %vm1102
      %vm1107 = vcmp.lt.s32.totalorder %v429, 16
      %vm1108 = vcmp.lt.s32.totalorder %v430, 16
      %vm1109 = vcmp.lt.s32.totalorder %v431, 16
      %vm1110 = vcmp.lt.s32.totalorder %v432, 16
      %vm1111 = vmand %vm1103, %vm1107
      %vm1112 = vmand %vm1104, %vm1108
      %vm1113 = vmand %vm1105, %vm1109
      %vm1114 = vmand %vm1106, %vm1110
      %vm1115 = vcmp.lt.s32.totalorder %v425, 16
      %vm1116 = vmand %vm1111, %vm1115
      %vm1117 = vmand %vm1112, %vm1115
      %vm1118 = vmand %vm1113, %vm1115
      %vm1119 = vmand %vm1114, %vm1115
      %v1120 = vsel %vm1116, %v1089, -inf
      %v1121 = vsel %vm1117, %v1090, -inf
      %v1122 = vsel %vm1118, %v1091, -inf
      %v1123 = vsel %vm1119, %v1092, -inf
      %v1124 = vmax.f32 %v1120, %v1121
      %v1125 = vmax.f32 %v1122, %v1123
      %v1126 = vmax.f32 %v1124, %v1125
      %1127 = vmax.xlane.f32.xlu0 %v1126
      %v1128 = vpop.xlane.xlu0 %1127
      %v1129 = vrot.slane %v1128, 4
      %v1130 = vmax.f32 %v1128, %v1129
      %v1131 = vrot.slane %v1130, 2
      %v1132 = vmax.f32 %v1130, %v1131
      %v1133 = vrot.slane %v1132, 1
      %v1134 = vmax.f32 %v1132, %v1133
      %s1135 = vtos %v1134
      %v1136 = vstv %s1135
      %vm1137 = vcmask 0
      %1138 = vst.msk [vmem:[%s408] sm:$0x1] %vm1137, %v1136
      %v1139 = vsel %vm1116, %v1089, inf
      %v1140 = vsel %vm1117, %v1090, inf
      %v1141 = vsel %vm1118, %v1091, inf
      %v1142 = vsel %vm1119, %v1092, inf
      %v1143 = vmin.f32 %v1139, %v1140
      %v1144 = vmin.f32 %v1141, %v1142
      %v1145 = vmin.f32 %v1143, %v1144
      %1146 = vmin.xlane.f32.xlu0 %v1145
      %v1147 = vpop.xlane.xlu0 %1146
      %v1148 = vrot.slane %v1147, 4
      %v1149 = vmin.f32 %v1147, %v1148
      %v1150 = vrot.slane %v1149, 2
      %v1151 = vmin.f32 %v1149, %v1150
      %v1152 = vrot.slane %v1151, 1
      %v1153 = vmin.f32 %v1151, %v1152
      %s1154 = vtos %v1153
      %v1155 = vstv %s1154
      %1156 = vst.msk [vmem:[%s414] sm:$0x1] %vm1137, %v1155
      %s1157 = smul.u32 2, %s22
      %p1158 = scmp.lt.s32.totalorder %s21, 1
      %s1159 = scalar_select %p1158, %s21, 1
      %p1160 = scmp.lt.s32.totalorder %s1157, 1
      %s1161 = scalar_select %p1160, %s1157, 1
      %s1162 = smul.addr %s1159, 2
      %s1163 = sadd.s32 %s1161, %s1162
      %s1164 = smul.addr %s1163, 8
      %s1165 = scalar_lea.vmem %s3, %s1164
      %p1166 = scmp.lt.s32.totalorder %s21, 1
      %s1167 = scalar_select %p1166, %s21, 1
      %p1168 = scmp.lt.s32.totalorder %s22, 0
      %s1169 = scalar_select %p1168, %s22, 0
      %s1170 = sadd.s32 %s1169, %s1167
      %s1171 = scalar_lea.vmem %s4, %s1170
      %p1172 = scmp.lt.s32.totalorder %s21, 1
      %s1173 = scalar_select %p1172, %s21, 1
      %p1174 = scmp.lt.s32.totalorder %s22, 0
      %s1175 = scalar_select %p1174, %s22, 0
      %s1176 = sadd.s32 %s1175, %s1173
      %s1177 = scalar_lea.vmem %s5, %s1176
      // Predicated region
      $region33: #{canny_edge_detector.2} parent=31 // pred_check
        %p1178 = pneg %p149
      $region34: #{canny_edge_detector.2} parent=31 // pred_check_branch
        %1180 = sbr.rel (%p1178) target = $region36
      $region35: #{canny_edge_detector.2} parent=31 // pred_region
        %s1181 = smul.u32 2, %s22
      $region36: #{canny_edge_detector.2} parent=31 // pred_fallthru
        _
      // Predicated region
      $region37: #{canny_edge_detector.2} parent=31 // pred_check
        %p1182 = pneg %p177
      $region38: #{canny_edge_detector.2} parent=31 // pred_check_branch
        %1184 = sbr.rel (%p1182) target = $region40
      $region39: #{canny_edge_detector.2} parent=31 // pred_region
        _
      $region40: #{canny_edge_detector.2} parent=31 // pred_fallthru
        _
      // Predicated region
      $region41: #{canny_edge_detector.2} parent=31 // pred_check
        %p1185 = pneg %p205
      $region42: #{canny_edge_detector.2} parent=31 // pred_check_branch
        %1187 = sbr.rel (%p1185) target = $region44
      $region43: #{canny_edge_detector.2} parent=31 // pred_region
        _
      $region44: #{canny_edge_detector.2} parent=31 // pred_fallthru
        _
    $region32: #{canny_edge_detector.2} parent=5 // pred_fallthru
      _
    %p1188 = scmp.le.s32.totalorder 2, %s12
    // Predicated region
    $region45: #{canny_edge_detector.2} parent=5 // pred_check
      %p1189 = pneg %p1188
    $region46: #{canny_edge_detector.2} parent=5 // pred_check_branch
      %1191 = sbr.rel (%p1189) target = $region48
    $region47: #{canny_edge_detector.2} parent=5 // pred_region
      %s1192 = ssub.s32 %s12, 2
      // Predicated region
      $region49: #{canny_edge_detector.2} parent=47 // pred_check
        %p1193 = pneg %p155
      $region50: #{canny_edge_detector.2} parent=47 // pred_check_branch
        %1195 = sbr.rel (%p1193) target = $region52
      $region51: #{canny_edge_detector.2} parent=47 // pred_region
        %s1196 = smul.u32 2, %s24
        %p1197 = scmp.lt.s32.totalorder %s23, 1
        %s1198 = scalar_select %p1197, %s23, 1
        %p1199 = scmp.lt.s32.totalorder %s1196, 1
        %s1200 = scalar_select %p1199, %s1196, 1
        %s1201 = smul.addr %s1198, 2
        %s1202 = sadd.s32 %s1200, %s1201
        %s1203 = smul.addr %s1202, 8
        %s1204 = scalar_lea.vmem %s3, %s1203
      $region52: #{canny_edge_detector.2} parent=47 // pred_fallthru
        _
      // Predicated region
      $region53: #{canny_edge_detector.2} parent=47 // pred_check
        %p1205 = pneg %p183
      $region54: #{canny_edge_detector.2} parent=47 // pred_check_branch
        %1207 = sbr.rel (%p1205) target = $region56
      $region55: #{canny_edge_detector.2} parent=47 // pred_region
        %p1208 = scmp.lt.s32.totalorder %s23, 1
        %s1209 = scalar_select %p1208, %s23, 1
        %p1210 = scmp.lt.s32.totalorder %s24, 0
        %s1211 = scalar_select %p1210, %s24, 0
        %s1212 = sadd.s32 %s1211, %s1209
        %s1213 = scalar_lea.vmem %s4, %s1212
      $region56: #{canny_edge_detector.2} parent=47 // pred_fallthru
        _
      // Predicated region
      $region57: #{canny_edge_detector.2} parent=47 // pred_check
        %p1214 = pneg %p211
      $region58: #{canny_edge_detector.2} parent=47 // pred_check_branch
        %1216 = sbr.rel (%p1214) target = $region60
      $region59: #{canny_edge_detector.2} parent=47 // pred_region
        %p1217 = scmp.lt.s32.totalorder %s23, 1
        %s1218 = scalar_select %p1217, %s23, 1
        %p1219 = scmp.lt.s32.totalorder %s24, 0
        %s1220 = scalar_select %p1219, %s24, 0
        %s1221 = sadd.s32 %s1220, %s1218
        %s1222 = scalar_lea.vmem %s5, %s1221
      $region60: #{canny_edge_detector.2} parent=47 // pred_fallthru
        _
    $region48: #{canny_edge_detector.2} parent=5 // pred_fallthru
      _
  $region6: #{canny_edge_detector.2} parent=0 // loop_footer
    %s16 = sadd.s32 1, %s12
  $region7: #{canny_edge_detector.2} parent=0 // loop_footer_branch
    %11 = sbr.rel target = $region3
  $region8: #{canny_edge_detector.2} parent=0 // loop_exit
    _

</llo_original>
